<compile_context>
chip_gen: v7x
topology: tpu7x:2x2x1
jax: 0.10.0
libtpu: 0.0.40
codegen_flags: <defaults>
</compile_context>

<pallas_src>
import functools
import math

import jax
import jax.numpy as jnp
from jax.experimental import pallas as pl
from jax.experimental.pallas import tpu as pltpu

LN_EPS = 1e-5   # PyTorch nn.LayerNorm default
LANE = 128
SUBLANE = 8


def _round_up(a, b):
    return (a + b - 1) // b * b


def _masked_layer_norm(v, true_n, mask):
    """LayerNorm (no affine, biased variance) over the last axis of `v`, which
    may carry zero-padded tail columns.  `true_n` is the real column count,
    `mask` marks real columns (None when there is no padding).  Padded input
    columns are exactly zero, so plain sums already equal true-column sums;
    only `centered` needs masking (padded cols would otherwise hold -mean)."""
    inv_n = 1.0 / true_n
    mean = jnp.sum(v, axis=-1, keepdims=True) * inv_n
    centered = v - mean
    if mask is not None:
        centered = jnp.where(mask, centered, 0.0)
    var = jnp.sum(centered * centered, axis=-1, keepdims=True) * inv_n
    return centered * jax.lax.rsqrt(var + LN_EPS)


def _gru_cell_kernel(x_ref, h_ref, wx_ref, wh_ref, bx_ref, bh_ref, out_ref, *, hidden):
    H = hidden                      # true hidden size
    Hp = out_ref.shape[-1]          # lane-padded hidden size (multiple of 128)

    if H != Hp:
        cand_mask = jax.lax.broadcasted_iota(jnp.int32, (1, Hp), 1) < H
        gate_mask = (jax.lax.broadcasted_iota(jnp.int32, (1, 2 * Hp), 1) % Hp) < H
    else:
        cand_mask = gate_mask = None

    # bf16 operands feed the MXU at native rate; accumulate in f32.
    x_bf = x_ref[...].astype(jnp.bfloat16)
    h_val = h_ref[...]
    h_bf = h_val.astype(jnp.bfloat16)
    h_f32 = h_val.astype(jnp.float32)

    # ---- gate block: [z | r] slabs, 2*Hp lane-aligned columns ---------------
    gx = jnp.dot(x_bf, wx_ref[:, : 2 * Hp],
                 preferred_element_type=jnp.float32) + bx_ref[:, : 2 * Hp]
    gh = jnp.dot(h_bf, wh_ref[:, : 2 * Hp],
                 preferred_element_type=jnp.float32) + bh_ref[:, : 2 * Hp]
    i2h = _masked_layer_norm(gx, 2 * H, gate_mask)   # LN over the TRUE 2H columns
    h2h = _masked_layer_norm(gh, 2 * H, gate_mask)
    gates = jax.nn.sigmoid(i2h + h2h)
    z_t = gates[:, :Hp]     # real cols 0..H-1 == module's gates[:, :H]
    r_t = gates[:, Hp:]     # real cols 0..H-1 == module's gates[:, -H:]

    # ---- candidate block (computed after the gate block is consumed) --------
    cx = jnp.dot(x_bf, wx_ref[:, 2 * Hp:],
                 preferred_element_type=jnp.float32) + bx_ref[:, 2 * Hp:]
    ch = jnp.dot(h_bf, wh_ref[:, 2 * Hp:],
                 preferred_element_type=jnp.float32) + bh_ref[:, 2 * Hp:]
    hhat_x = _masked_layer_norm(cx, H, cand_mask)
    hhat_h = _masked_layer_norm(ch, H, cand_mask)
    h_hat = jnp.tanh(hhat_x + r_t * hhat_h)

    # Lane-dense (tb, Hp) store; padded columns come out exactly 0.
    out_ref[...] = ((1.0 - z_t) * h_f32 + z_t * h_hat).astype(out_ref.dtype)


def fuse_params(params, hidden_size, *, matmul_dtype=jnp.bfloat16):
    """One-time parameter prep (hoisted out of the per-step call):
    * split each Linear's output into z / r / candidate segments,
    * zero-pad every segment to Hp = round_up(H, 128) columns (lane-dense),
    * fuse x-side and h-side weights into single wide matrices,
    * pad wh's rows to Hp (to match the lane-padded h), cast to matmul dtype."""
    H = hidden_size
    Hp = _round_up(H, LANE)

    def pad_cols(a):
        return jnp.pad(a, ((0, 0), (0, Hp - a.shape[1])))

    def fuse(gate, cand):   # gate: (..., 2H), cand: (..., H)  ->  (..., 3*Hp)
        return jnp.concatenate(
            [pad_cols(gate[:, :H]), pad_cols(gate[:, H:]), pad_cols(cand)], axis=1)

    wx = fuse(params["w_i2h"], params["w_hw"]).astype(matmul_dtype)
    wh = fuse(params["w_h2h"], params["w_hu"])
    wh = jnp.pad(wh, ((0, Hp - H), (0, 0))).astype(matmul_dtype)  # K rows match padded h
    bx = fuse(params["b_i2h"], params["b_hw"]).astype(jnp.float32)
    bh = fuse(params["b_h2h"], params["b_hu"]).astype(jnp.float32)
    return {"wx": wx, "wh": wh, "bx": bx, "bh": bh}


def layer_norm_gru_cell(x, h, fused, *, hidden_size, block_b=256):
    """Single LayerNorm-GRU cell step. `fused` comes from fuse_params()."""
    B, I = x.shape
    H = hidden_size
    wx, wh, bx, bh = fused["wx"], fused["wh"], fused["bx"], fused["bh"]
    G = wx.shape[1]
    Hp = G // 3
    out_dtype = h.dtype

    # Lane-pad h so the h tile load, the (1-z)*h math, and the output store are
    # all 128-lane dense.
    if h.shape[-1] != Hp:
        h = jnp.pad(h, ((0, 0), (0, Hp - h.shape[-1])))

    # Batch tile: multiple of 8 sublanes; keep >= 2 grid steps when B allows so
    # the "parallel" batch axis can shard across v7x's two TensorCores.
    tb = min(_round_up(block_b, SUBLANE), _round_up(B, SUBLANE))
    if B > SUBLANE and _round_up(B, tb) // tb < 2:
        tb = _round_up(pl.cdiv(B, 2), SUBLANE)
    Bp = _round_up(B, tb)
    if Bp != B:
        x = jnp.pad(x, ((0, Bp - B), (0, 0)))
        h = jnp.pad(h, ((0, Bp - B), (0, 0)))
    grid = (Bp // tb,)

    x_item = jnp.dtype(x.dtype).itemsize
    h_item = jnp.dtype(h.dtype).itemsize
    o_item = jnp.dtype(out_dtype).itemsize
    w_item = jnp.dtype(wx.dtype).itemsize
    weight_bytes = (wx.size + wh.size) * w_item + (bx.size + bh.size) * 4
    tile_bytes = tb * (I * x_item + Hp * h_item + Hp * o_item)
    # Single-buffered resident weights + double-buffered streamed tiles, with
    # ~2x headroom for f32 gate/candidate intermediates. Capped at 64 MiB so it
    # is valid on v7x; raise toward ~100 MiB on v5e/v6e for very large I/H.
    vmem_limit = int(min(64 * 2 ** 20,
                         max(32 * 2 ** 20, 2 * (weight_bytes + 2 * tile_bytes))))

    cost = pl.CostEstimate(
        flops=2 * Bp * (I + Hp) * G,
        transcendentals=Bp * (3 * Hp + 4),          # sigmoid + tanh + 4 rsqrt / row
        bytes_accessed=(Bp * I * x_item + Bp * Hp * h_item   # streamed x/h tiles
                        + weight_bytes                       # resident, read once
                        + Bp * Hp * o_item),                 # output
    )

    kernel = functools.partial(_gru_cell_kernel, hidden=H)

    def resident(shape):
        # Constant block index -> single-buffer (no pointless double-buffering).
        return pl.BlockSpec(shape, lambda b: (0, 0), pipeline_mode=pl.Buffered(1))

    out = pl.pallas_call(
        kernel,
        out_shape=jax.ShapeDtypeStruct((Bp, Hp), out_dtype),
        grid_spec=pltpu.PrefetchScalarGridSpec(
            num_scalar_prefetch=0,
            grid=grid,
            in_specs=[
                pl.BlockSpec((tb, I), lambda b: (b, 0)),    # x tile (pipelined)
                pl.BlockSpec((tb, Hp), lambda b: (b, 0)),   # h tile (pipelined)
                resident((I, G)),                           # wx: VMEM-resident, 1 buf
                resident((Hp, G)),                          # wh
                resident((1, G)),                           # bx
                resident((1, G)),                           # bh
            ],
            out_specs=pl.BlockSpec((tb, Hp), lambda b: (b, 0)),
        ),
        compiler_params=pltpu.CompilerParams(
            dimension_semantics=("parallel",),              # megacore on v7x
            vmem_limit_bytes=vmem_limit,
        ),
        cost_estimate=cost,
    )(x, h, wx, wh, bx, bh)

    return out[:B, :H]


def init_params(key, input_size, hidden_size, dtype=jnp.float32):
    """Deterministic init mirroring reset_parameters(): U(-std, std), std=1/sqrt(H).
    Linear weights are stored transposed as (in_features, out_features)."""
    std = 1.0 / math.sqrt(hidden_size)
    keys = jax.random.split(key, 8)
    u = lambda k, shape: jax.random.uniform(k, shape, dtype, minval=-std, maxval=std)
    return {
        "w_i2h": u(keys[0], (input_size, 2 * hidden_size)),
        "b_i2h": u(keys[1], (1, 2 * hidden_size)),
        "w_h2h": u(keys[2], (hidden_size, 2 * hidden_size)),
        "b_h2h": u(keys[3], (1, 2 * hidden_size)),
        "w_hw": u(keys[4], (input_size, hidden_size)),
        "b_hw": u(keys[5], (1, hidden_size)),
        "w_hu": u(keys[6], (hidden_size, hidden_size)),
        "b_hu": u(keys[7], (1, hidden_size)),
    }


def _reference(x, h, p, *, cast_bf16):
    """Pure-JAX reference of the PyTorch module forward.
    cast_bf16=True mimics the kernel's bf16 MXU operands."""
    def ln(v):
        m = v.mean(-1, keepdims=True)
        var = ((v - m) ** 2).mean(-1, keepdims=True)
        return (v - m) / jnp.sqrt(var + LN_EPS)

    def mm(a, w):
        if cast_bf16:
            a = a.astype(jnp.bfloat16).astype(jnp.float32)
            w = w.astype(jnp.bfloat16).astype(jnp.float32)
        return jnp.dot(a, w, precision=jax.lax.Precision.HIGHEST)

    H = h.shape[-1]
    i2h = ln(mm(x, p["w_i2h"]) + p["b_i2h"])
    h2h = ln(mm(h, p["w_h2h"]) + p["b_h2h"])
    gates = jax.nn.sigmoid(i2h + h2h)
    z, r = gates[:, :H], gates[:, -H:]
    hf = ln(mm(x, p["w_hw"]) + p["b_hw"])
    hl = ln(mm(h, p["w_hu"]) + p["b_hu"])
    h_hat = jnp.tanh(hf + r * hl)
    return (1.0 - z) * h + z * h_hat


if __name__ == "__main__":
    B, INPUT, HIDDEN = 256, 64, 32

    key = jax.random.PRNGKey(0)
    kx, kh, kp = jax.random.split(key, 3)
    x = jax.random.normal(kx, (B, INPUT), jnp.float32)
    h = jax.random.normal(kh, (B, HIDDEN), jnp.float32)
    params = init_params(kp, INPUT, HIDDEN)

    # One-time parameter fusion / lane padding (hoisted out of the per-step call).
    fused = fuse_params(params, HIDDEN)

    fwd = jax.jit(layer_norm_gru_cell, static_argnames=("hidden_size", "block_b"))
    h_t = jax.block_until_ready(fwd(x, h, fused, hidden_size=HIDDEN))

    assert h_t.shape == (B, HIDDEN)
    assert bool(jnp.all(jnp.isfinite(h_t)))

    # Tight check vs a reference using the same bf16 matmul operands.
    ref_bf16 = _reference(x, h, params, cast_bf16=True)
    assert jnp.allclose(h_t, ref_bf16, atol=2e-3, rtol=2e-3), "mismatch vs bf16 reference"

    # Loose check vs the pure-f32 module semantics (only bf16 matmul rounding differs).
    ref_f32 = _reference(x, h, params, cast_bf16=False)
    assert jnp.allclose(h_t, ref_f32, atol=5e-2, rtol=5e-2), "mismatch vs f32 reference"

    print("KERNEL_OK")
</pallas_src>

<mosaic_0001>
module attributes {stable_mosaic.version = 11 : i64} {
  func.func @_gru_cell_kernel(%arg0: i32, %arg1: memref<128x64xf32, #tpu.memory_space<vmem>>, %arg2: memref<128x128xf32, #tpu.memory_space<vmem>>, %arg3: memref<64x384xbf16, #tpu.memory_space<vmem>>, %arg4: memref<128x384xbf16, #tpu.memory_space<vmem>>, %arg5: memref<1x384xf32, #tpu.memory_space<vmem>>, %arg6: memref<1x384xf32, #tpu.memory_space<vmem>>, %arg7: memref<128x128xf32, #tpu.memory_space<vmem>>) attributes {dimension_semantics = [#tpu.dimension_semantics<parallel>], iteration_bounds = array<i64: 2>, scalar_prefetch = 0 : i64, scratch_operands = 0 : i64, tpu.core_type = #tpu.core_type<tc>, window_params = [{transform_indices = @transform_0, window_bounds = array<i64: 128, 64>}, {transform_indices = @transform_1, window_bounds = array<i64: 128, 128>}, {pipeline_mode = #tpu.pipeline_mode<synchronous>, transform_indices = @transform_2, window_bounds = array<i64: 64, 384>}, {pipeline_mode = #tpu.pipeline_mode<synchronous>, transform_indices = @transform_3, window_bounds = array<i64: 128, 384>}, {pipeline_mode = #tpu.pipeline_mode<synchronous>, transform_indices = @transform_4, window_bounds = array<i64: 1, 384>}, {pipeline_mode = #tpu.pipeline_mode<synchronous>, transform_indices = @transform_5, window_bounds = array<i64: 1, 384>}, {transform_indices = @transform_6, window_bounds = array<i64: 128, 128>}]} {
    %0 = tpu.iota {dimensions = array<i32: 1>} : vector<1x128xi32>
    %c32_i32 = arith.constant 32 : i32
    %1 = vector.broadcast %c32_i32 : i32 to vector<1x128xi32>
    %2 = arith.cmpi slt, %0, %1 : vector<1x128xi32>
    %3 = tpu.iota {dimensions = array<i32: 1>} : vector<1x256xi32>
    %c128_i32 = arith.constant 128 : i32
    %c0_i32 = arith.constant 0 : i32
    %4 = arith.cmpi eq, %c128_i32, %c0_i32 : i32
    %c1_i32 = arith.constant 1 : i32
    %5 = arith.select %4, %c1_i32, %c128_i32 : i32
    %6 = vector.broadcast %5 : i32 to vector<1x256xi32>
    %7 = arith.remsi %3, %6 : vector<1x256xi32>
    %c0_i32_0 = arith.constant 0 : i32
    %8 = vector.broadcast %c0_i32_0 : i32 to vector<1x256xi32>
    %9 = arith.cmpi ne, %7, %8 : vector<1x256xi32>
    %c0_i32_1 = arith.constant 0 : i32
    %10 = vector.broadcast %c0_i32_1 : i32 to vector<1x256xi32>
    %11 = arith.cmpi slt, %7, %10 : vector<1x256xi32>
    %c0_i32_2 = arith.constant 0 : i32
    %12 = arith.cmpi slt, %5, %c0_i32_2 : i32
    %13 = vector.broadcast %12 : i1 to vector<1x256xi1>
    %14 = vector.broadcast %13 : vector<1x256xi1> to vector<1x256xi1>
    %15 = arith.xori %11, %14 : vector<1x256xi1>
    %16 = arith.andi %15, %9 : vector<1x256xi1>
    %17 = vector.broadcast %5 : i32 to vector<1x256xi32>
    %18 = arith.addi %7, %17 : vector<1x256xi32>
    %19 = arith.select %16, %18, %7 : vector<1x256xi1>, vector<1x256xi32>
    %c32_i32_3 = arith.constant 32 : i32
    %20 = vector.broadcast %c32_i32_3 : i32 to vector<1x256xi32>
    %21 = arith.cmpi slt, %19, %20 : vector<1x256xi32>
    %c0 = arith.constant 0 : index
    %c0_4 = arith.constant 0 : index
    %22 = vector.load %arg1[%c0, %c0_4] : memref<128x64xf32, #tpu.memory_space<vmem>>, vector<128x64xf32>
    %23 = arith.truncf %22 : vector<128x64xf32> to vector<128x64xbf16>
    %c0_5 = arith.constant 0 : index
    %c0_6 = arith.constant 0 : index
    %24 = vector.load %arg2[%c0_5, %c0_6] : memref<128x128xf32, #tpu.memory_space<vmem>>, vector<128x128xf32>
    %25 = arith.truncf %24 : vector<128x128xf32> to vector<128x128xbf16>
    %c0_7 = arith.constant 0 : index
    %c0_8 = arith.constant 0 : index
    %26 = vector.load %arg3[%c0_7, %c0_8] : memref<64x384xbf16, #tpu.memory_space<vmem>>, vector<64x256xbf16>
    %cst = arith.constant dense<0.000000e+00> : vector<128x256xf32>
    %27 = tpu.matmul %23, %26, %cst {dimension_numbers = #tpu.dot_dimension_numbers<[1], [0], [0], [1], [0, 0, 1, 1], [], []>} : vector<128x64xbf16>, vector<64x256xbf16>, vector<128x256xf32> -> vector<128x256xf32>
    %c0_9 = arith.constant 0 : index
    %c0_10 = arith.constant 0 : index
    %28 = vector.load %arg5[%c0_9, %c0_10] : memref<1x384xf32, #tpu.memory_space<vmem>>, vector<1x256xf32>
    %29 = vector.broadcast %28 : vector<1x256xf32> to vector<128x256xf32>
    %30 = arith.addf %27, %29 : vector<128x256xf32>
    %c0_11 = arith.constant 0 : index
    %c0_12 = arith.constant 0 : index
    %31 = vector.load %arg4[%c0_11, %c0_12] : memref<128x384xbf16, #tpu.memory_space<vmem>>, vector<128x256xbf16>
    %cst_13 = arith.constant dense<0.000000e+00> : vector<128x256xf32>
    %32 = tpu.matmul %25, %31, %cst_13 {dimension_numbers = #tpu.dot_dimension_numbers<[1], [0], [0], [1], [0, 0, 1, 1], [], []>} : vector<128x128xbf16>, vector<128x256xbf16>, vector<128x256xf32> -> vector<128x256xf32>
    %c0_14 = arith.constant 0 : index
    %c0_15 = arith.constant 0 : index
    %33 = vector.load %arg6[%c0_14, %c0_15] : memref<1x384xf32, #tpu.memory_space<vmem>>, vector<1x256xf32>
    %34 = vector.broadcast %33 : vector<1x256xf32> to vector<128x256xf32>
    %35 = arith.addf %32, %34 : vector<128x256xf32>
    %cst_16 = arith.constant dense<0.000000e+00> : vector<128xf32>
    %36 = vector.multi_reduction <add>, %30, %cst_16 [1] : vector<128x256xf32> to vector<128xf32>
    %37 = vector.shape_cast %36 : vector<128xf32> to vector<128x1xf32>
    %cst_17 = arith.constant 1.562500e-02 : f32
    %38 = vector.broadcast %cst_17 : f32 to vector<128x1xf32>
    %39 = arith.mulf %37, %38 : vector<128x1xf32>
    %40 = vector.broadcast %39 : vector<128x1xf32> to vector<128x256xf32>
    %41 = arith.subf %30, %40 : vector<128x256xf32>
    %cst_18 = arith.constant 0.000000e+00 : f32
    %42 = vector.shape_cast %21 : vector<1x256xi1> to vector<1x256xi1>
    %43 = vector.broadcast %42 : vector<1x256xi1> to vector<128x256xi1>
    %44 = vector.broadcast %cst_18 : f32 to vector<128x256xf32>
    %45 = arith.select %43, %41, %44 : vector<128x256xi1>, vector<128x256xf32>
    %46 = arith.mulf %45, %45 : vector<128x256xf32>
    %cst_19 = arith.constant dense<0.000000e+00> : vector<128xf32>
    %47 = vector.multi_reduction <add>, %46, %cst_19 [1] : vector<128x256xf32> to vector<128xf32>
    %48 = vector.shape_cast %47 : vector<128xf32> to vector<128x1xf32>
    %cst_20 = arith.constant 1.562500e-02 : f32
    %49 = vector.broadcast %cst_20 : f32 to vector<128x1xf32>
    %50 = arith.mulf %48, %49 : vector<128x1xf32>
    %cst_21 = arith.constant 9.99999974E-6 : f32
    %51 = vector.broadcast %cst_21 : f32 to vector<128x1xf32>
    %52 = arith.addf %50, %51 : vector<128x1xf32>
    %53 = math.rsqrt %52 : vector<128x1xf32>
    %54 = vector.broadcast %53 : vector<128x1xf32> to vector<128x256xf32>
    %55 = arith.mulf %45, %54 : vector<128x256xf32>
    %cst_22 = arith.constant dense<0.000000e+00> : vector<128xf32>
    %56 = vector.multi_reduction <add>, %35, %cst_22 [1] : vector<128x256xf32> to vector<128xf32>
    %57 = vector.shape_cast %56 : vector<128xf32> to vector<128x1xf32>
    %cst_23 = arith.constant 1.562500e-02 : f32
    %58 = vector.broadcast %cst_23 : f32 to vector<128x1xf32>
    %59 = arith.mulf %57, %58 : vector<128x1xf32>
    %60 = vector.broadcast %59 : vector<128x1xf32> to vector<128x256xf32>
    %61 = arith.subf %35, %60 : vector<128x256xf32>
    %cst_24 = arith.constant 0.000000e+00 : f32
    %62 = vector.shape_cast %21 : vector<1x256xi1> to vector<1x256xi1>
    %63 = vector.broadcast %62 : vector<1x256xi1> to vector<128x256xi1>
    %64 = vector.broadcast %cst_24 : f32 to vector<128x256xf32>
    %65 = arith.select %63, %61, %64 : vector<128x256xi1>, vector<128x256xf32>
    %66 = arith.mulf %65, %65 : vector<128x256xf32>
    %cst_25 = arith.constant dense<0.000000e+00> : vector<128xf32>
    %67 = vector.multi_reduction <add>, %66, %cst_25 [1] : vector<128x256xf32> to vector<128xf32>
    %68 = vector.shape_cast %67 : vector<128xf32> to vector<128x1xf32>
    %cst_26 = arith.constant 1.562500e-02 : f32
    %69 = vector.broadcast %cst_26 : f32 to vector<128x1xf32>
    %70 = arith.mulf %68, %69 : vector<128x1xf32>
    %cst_27 = arith.constant 9.99999974E-6 : f32
    %71 = vector.broadcast %cst_27 : f32 to vector<128x1xf32>
    %72 = arith.addf %70, %71 : vector<128x1xf32>
    %73 = math.rsqrt %72 : vector<128x1xf32>
    %74 = vector.broadcast %73 : vector<128x1xf32> to vector<128x256xf32>
    %75 = arith.mulf %65, %74 : vector<128x256xf32>
    %76 = arith.addf %55, %75 : vector<128x256xf32>
    %77 = arith.negf %76 : vector<128x256xf32>
    %78 = math.exp %77 : vector<128x256xf32>
    %cst_28 = arith.constant 1.000000e+00 : f32
    %79 = vector.broadcast %cst_28 : f32 to vector<128x256xf32>
    %80 = arith.addf %79, %78 : vector<128x256xf32>
    %81 = arith.divf %79, %80 : vector<128x256xf32>
    %82 = vector.extract_strided_slice %81 {offsets = [0, 0], sizes = [128, 128], strides = [1, 1]} : vector<128x256xf32> to vector<128x128xf32>
    %83 = vector.extract_strided_slice %81 {offsets = [0, 128], sizes = [128, 128], strides = [1, 1]} : vector<128x256xf32> to vector<128x128xf32>
    %c0_29 = arith.constant 0 : index
    %c256 = arith.constant 256 : index
    %84 = vector.load %arg3[%c0_29, %c256] : memref<64x384xbf16, #tpu.memory_space<vmem>>, vector<64x128xbf16>
    %cst_30 = arith.constant dense<0.000000e+00> : vector<128x128xf32>
    %85 = tpu.matmul %23, %84, %cst_30 {dimension_numbers = #tpu.dot_dimension_numbers<[1], [0], [0], [1], [0, 0, 1, 1], [], []>} : vector<128x64xbf16>, vector<64x128xbf16>, vector<128x128xf32> -> vector<128x128xf32>
    %c0_31 = arith.constant 0 : index
    %c256_32 = arith.constant 256 : index
    %86 = vector.load %arg5[%c0_31, %c256_32] : memref<1x384xf32, #tpu.memory_space<vmem>>, vector<1x128xf32>
    %87 = vector.broadcast %86 : vector<1x128xf32> to vector<128x128xf32>
    %88 = arith.addf %85, %87 : vector<128x128xf32>
    %c0_33 = arith.constant 0 : index
    %c256_34 = arith.constant 256 : index
    %89 = vector.load %arg4[%c0_33, %c256_34] : memref<128x384xbf16, #tpu.memory_space<vmem>>, vector<128x128xbf16>
    %cst_35 = arith.constant dense<0.000000e+00> : vector<128x128xf32>
    %90 = tpu.matmul %25, %89, %cst_35 {dimension_numbers = #tpu.dot_dimension_numbers<[1], [0], [0], [1], [0, 0, 1, 1], [], []>} : vector<128x128xbf16>, vector<128x128xbf16>, vector<128x128xf32> -> vector<128x128xf32>
    %c0_36 = arith.constant 0 : index
    %c256_37 = arith.constant 256 : index
    %91 = vector.load %arg6[%c0_36, %c256_37] : memref<1x384xf32, #tpu.memory_space<vmem>>, vector<1x128xf32>
    %92 = vector.broadcast %91 : vector<1x128xf32> to vector<128x128xf32>
    %93 = arith.addf %90, %92 : vector<128x128xf32>
    %cst_38 = arith.constant dense<0.000000e+00> : vector<128xf32>
    %94 = vector.multi_reduction <add>, %88, %cst_38 [1] : vector<128x128xf32> to vector<128xf32>
    %95 = vector.shape_cast %94 : vector<128xf32> to vector<128x1xf32>
    %cst_39 = arith.constant 3.125000e-02 : f32
    %96 = vector.broadcast %cst_39 : f32 to vector<128x1xf32>
    %97 = arith.mulf %95, %96 : vector<128x1xf32>
    %98 = vector.broadcast %97 : vector<128x1xf32> to vector<128x128xf32>
    %99 = arith.subf %88, %98 : vector<128x128xf32>
    %cst_40 = arith.constant 0.000000e+00 : f32
    %100 = vector.shape_cast %2 : vector<1x128xi1> to vector<1x128xi1>
    %101 = vector.broadcast %100 : vector<1x128xi1> to vector<128x128xi1>
    %102 = vector.broadcast %cst_40 : f32 to vector<128x128xf32>
    %103 = arith.select %101, %99, %102 : vector<128x128xi1>, vector<128x128xf32>
    %104 = arith.mulf %103, %103 : vector<128x128xf32>
    %cst_41 = arith.constant dense<0.000000e+00> : vector<128xf32>
    %105 = vector.multi_reduction <add>, %104, %cst_41 [1] : vector<128x128xf32> to vector<128xf32>
    %106 = vector.shape_cast %105 : vector<128xf32> to vector<128x1xf32>
    %cst_42 = arith.constant 3.125000e-02 : f32
    %107 = vector.broadcast %cst_42 : f32 to vector<128x1xf32>
    %108 = arith.mulf %106, %107 : vector<128x1xf32>
    %cst_43 = arith.constant 9.99999974E-6 : f32
    %109 = vector.broadcast %cst_43 : f32 to vector<128x1xf32>
    %110 = arith.addf %108, %109 : vector<128x1xf32>
    %111 = math.rsqrt %110 : vector<128x1xf32>
    %112 = vector.broadcast %111 : vector<128x1xf32> to vector<128x128xf32>
    %113 = arith.mulf %103, %112 : vector<128x128xf32>
    %cst_44 = arith.constant dense<0.000000e+00> : vector<128xf32>
    %114 = vector.multi_reduction <add>, %93, %cst_44 [1] : vector<128x128xf32> to vector<128xf32>
    %115 = vector.shape_cast %114 : vector<128xf32> to vector<128x1xf32>
    %cst_45 = arith.constant 3.125000e-02 : f32
    %116 = vector.broadcast %cst_45 : f32 to vector<128x1xf32>
    %117 = arith.mulf %115, %116 : vector<128x1xf32>
    %118 = vector.broadcast %117 : vector<128x1xf32> to vector<128x128xf32>
    %119 = arith.subf %93, %118 : vector<128x128xf32>
    %cst_46 = arith.constant 0.000000e+00 : f32
    %120 = vector.shape_cast %2 : vector<1x128xi1> to vector<1x128xi1>
    %121 = vector.broadcast %120 : vector<1x128xi1> to vector<128x128xi1>
    %122 = vector.broadcast %cst_46 : f32 to vector<128x128xf32>
    %123 = arith.select %121, %119, %122 : vector<128x128xi1>, vector<128x128xf32>
    %124 = arith.mulf %123, %123 : vector<128x128xf32>
    %cst_47 = arith.constant dense<0.000000e+00> : vector<128xf32>
    %125 = vector.multi_reduction <add>, %124, %cst_47 [1] : vector<128x128xf32> to vector<128xf32>
    %126 = vector.shape_cast %125 : vector<128xf32> to vector<128x1xf32>
    %cst_48 = arith.constant 3.125000e-02 : f32
    %127 = vector.broadcast %cst_48 : f32 to vector<128x1xf32>
    %128 = arith.mulf %126, %127 : vector<128x1xf32>
    %cst_49 = arith.constant 9.99999974E-6 : f32
    %129 = vector.broadcast %cst_49 : f32 to vector<128x1xf32>
    %130 = arith.addf %128, %129 : vector<128x1xf32>
    %131 = math.rsqrt %130 : vector<128x1xf32>
    %132 = vector.broadcast %131 : vector<128x1xf32> to vector<128x128xf32>
    %133 = arith.mulf %123, %132 : vector<128x128xf32>
    %134 = arith.mulf %83, %133 : vector<128x128xf32>
    %135 = arith.addf %113, %134 : vector<128x128xf32>
    %136 = math.tanh %135 : vector<128x128xf32>
    %cst_50 = arith.constant 1.000000e+00 : f32
    %137 = vector.broadcast %cst_50 : f32 to vector<128x128xf32>
    %138 = arith.subf %137, %82 : vector<128x128xf32>
    %139 = arith.mulf %138, %24 : vector<128x128xf32>
    %140 = arith.mulf %82, %136 : vector<128x128xf32>
    %141 = arith.addf %139, %140 : vector<128x128xf32>
    %c0_51 = arith.constant 0 : index
    %c0_52 = arith.constant 0 : index
    %142 = vector.load %arg7[%c0_51, %c0_52] : memref<128x128xf32, #tpu.memory_space<vmem>>, vector<128x128xf32>
    tpu.vector_store %arg7[%c0_51, %c0_52], %141 {strides = array<i32>} : memref<128x128xf32, #tpu.memory_space<vmem>>, vector<128x128xf32>,
    return
  }
  func.func @transform_0(%arg0: i32) -> (i32, i32) {
    %c0_i32 = arith.constant 0 : i32
    %c0_i32_0 = arith.constant 0 : i32
    return %arg0, %c0_i32 : i32, i32
  }
  func.func @transform_1(%arg0: i32) -> (i32, i32) {
    %c0_i32 = arith.constant 0 : i32
    %c0_i32_0 = arith.constant 0 : i32
    return %arg0, %c0_i32 : i32, i32
  }
  func.func @transform_2(%arg0: i32) -> (i32, i32) {
    %c0_i32 = arith.constant 0 : i32
    %c0_i32_0 = arith.constant 0 : i32
    %c0_i32_1 = arith.constant 0 : i32
    return %c0_i32, %c0_i32_0 : i32, i32
  }
  func.func @transform_3(%arg0: i32) -> (i32, i32) {
    %c0_i32 = arith.constant 0 : i32
    %c0_i32_0 = arith.constant 0 : i32
    %c0_i32_1 = arith.constant 0 : i32
    return %c0_i32, %c0_i32_0 : i32, i32
  }
  func.func @transform_4(%arg0: i32) -> (i32, i32) {
    %c0_i32 = arith.constant 0 : i32
    %c0_i32_0 = arith.constant 0 : i32
    %c0_i32_1 = arith.constant 0 : i32
    return %c0_i32, %c0_i32_0 : i32, i32
  }
  func.func @transform_5(%arg0: i32) -> (i32, i32) {
    %c0_i32 = arith.constant 0 : i32
    %c0_i32_0 = arith.constant 0 : i32
    %c0_i32_1 = arith.constant 0 : i32
    return %c0_i32, %c0_i32_0 : i32, i32
  }
  func.func @transform_6(%arg0: i32) -> (i32, i32) {
    %c0_i32 = arith.constant 0 : i32
    %c0_i32_0 = arith.constant 0 : i32
    return %arg0, %c0_i32 : i32, i32
  }
}

</mosaic_0001>

<llo_original>
// kernel: layer_norm_gru_cell.1
$region0: #{layer_norm_gru_cell.1}
  #allocation0 [shape = 'u32[]', space=smem, size = 0x4, offset = 0x4, fixed_abs, tag = 'smem constant byte address 0x4 - core index']
  #allocation1 [shape = 'u32[144,128]{1,0:T(1,128)}', space=vmem, size = 0x12000, scoped, tag = 'internal scratch']
  %s0 = inlined_call_operand.vmem [shape: f32[256,64], index: 0, kind: input, shape index: {}]
  %s1 = inlined_call_operand.vmem [shape: f32[256,128], index: 1, kind: input, shape index: {}]
  %s2 = inlined_call_operand.vmem [shape: bf16[64,384], index: 2, kind: input, shape index: {}]
  %s3 = inlined_call_operand.vmem [shape: bf16[128,384], index: 3, kind: input, shape index: {}]
  %s4 = inlined_call_operand.vmem [shape: f32[1,384], index: 4, kind: input, shape index: {}]
  %s5 = inlined_call_operand.vmem [shape: f32[1,384], index: 5, kind: input, shape index: {}]
  %s6 = inlined_call_operand.vmem [shape: f32[256,128], index: 6, kind: output, shape index: {}]
  %s7 = sld [smem:[#allocation0]]
  $region57: #{layer_norm_gru_cell.1} parent=0
    _
  %s9 = ssub.s32 1, %s7
  %s10 = scalar_select 0, %s9, %s7
  loop: start=0, step=1, limit=4
  $region2: #{layer_norm_gru_cell.1} parent=0 // loop_pre_header
    _
  $region3: #{layer_norm_gru_cell.1} parent=0 // loop_header
    %s12 = sphi 0, %s16
    %p13 = scmp.ge.s32.totalorder %s12, 4
    %s22 = sphi 0, %s24
    %s25 = sphi 0, %s22
    %s26 = sphi 0, %s25
    %s42 = sphi 0, %s26
    %s48 = sphi 0, %s50
    %s51 = sphi 0, %s48
    %s52 = sphi 0, %s51
    %s68 = sphi 0, %s52
    %s72 = sphi 0, %s72
    %s74 = sphi 0, %s72
    %s75 = sphi 0, %s74
    %s89 = sphi 0, %s75
    %s93 = sphi 0, %s93
    %s95 = sphi 0, %s93
    %s96 = sphi 0, %s95
    %s110 = sphi 0, %s96
    %s114 = sphi 0, %s114
    %s116 = sphi 0, %s114
    %s117 = sphi 0, %s116
    %s131 = sphi 0, %s117
    %s135 = sphi 0, %s135
    %s137 = sphi 0, %s135
    %s138 = sphi 0, %s137
    %s152 = sphi 0, %s138
    %s158 = sphi 0, %s160
    %s161 = sphi 0, %s158
    %s162 = sphi 0, %s161
    %s178 = sphi 0, %s162
  $region4: #{layer_norm_gru_cell.1} parent=0 // loop_header_branch
    %15 = sbr.rel (%p13) target = $region8
  $region5: #{layer_norm_gru_cell.1} parent=0 // loop_body
    %s17 = ssub.s32 %s12, 1
    %s18 = ssub.s32 %s12, 2
    %s19 = sadd.s32 %s12, 1
    %s20 = ssub.s32 %s12, %s19
    %p21 = scmp.eq.s32.totalorder %s20, 0
    %s23 = sadd.s32 %s22, 1
    %s24 = scalar_select %p21, %s22, %s23
    %p27 = pneg %p21
    %p28 = scmp.eq.s32.totalorder %s12, 1
    %p29 = por %p27, %p28
    %p30 = scmp.ne.s32.totalorder %s22, %s25
    %p31 = scmp.eq.s32.totalorder %s12, 0
    %p32 = por %p30, %p31
    %p33 = scmp.ne.s32.totalorder %s22, %s25
    %p34 = scmp.eq.s32.totalorder %s17, 1
    %p35 = por %p33, %p34
    %p36 = scmp.ne.s32.totalorder %s25, %s26
    %p37 = scmp.eq.s32.totalorder %s17, 0
    %p38 = por %p36, %p37
    %p39 = scmp.ne.s32.totalorder %s25, %s26
    %p40 = scmp.eq.s32.totalorder %s18, 1
    %p41 = por %p39, %p40
    %p43 = scmp.ne.s32.totalorder %s26, %s42
    %p44 = scmp.eq.s32.totalorder %s18, 0
    %p45 = por %p43, %p44
    %s46 = ssub.s32 %s12, %s19
    %p47 = scmp.eq.s32.totalorder %s46, 0
    %s49 = sadd.s32 %s48, 1
    %s50 = scalar_select %p47, %s48, %s49
    %p53 = pneg %p47
    %p54 = scmp.eq.s32.totalorder %s12, 1
    %p55 = por %p53, %p54
    %p56 = scmp.ne.s32.totalorder %s48, %s51
    %p57 = scmp.eq.s32.totalorder %s12, 0
    %p58 = por %p56, %p57
    %p59 = scmp.ne.s32.totalorder %s48, %s51
    %p60 = scmp.eq.s32.totalorder %s17, 1
    %p61 = por %p59, %p60
    %p62 = scmp.ne.s32.totalorder %s51, %s52
    %p63 = scmp.eq.s32.totalorder %s17, 0
    %p64 = por %p62, %p63
    %p65 = scmp.ne.s32.totalorder %s51, %s52
    %p66 = scmp.eq.s32.totalorder %s18, 1
    %p67 = por %p65, %p66
    %p69 = scmp.ne.s32.totalorder %s52, %s68
    %p70 = scmp.eq.s32.totalorder %s18, 0
    %p71 = por %p69, %p70
    %s73 = sadd.s32 %s72, 1
    %p76 = scmp.eq.s32.totalorder %s12, 1
    %p77 = scmp.ne.s32.totalorder %s72, %s74
    %p78 = scmp.eq.s32.totalorder %s12, 0
    %p79 = por %p77, %p78
    %p80 = scmp.ne.s32.totalorder %s72, %s74
    %p81 = scmp.eq.s32.totalorder %s17, 1
    %p82 = por %p80, %p81
    %p83 = scmp.ne.s32.totalorder %s74, %s75
    %p84 = scmp.eq.s32.totalorder %s17, 0
    %p85 = por %p83, %p84
    %p86 = scmp.ne.s32.totalorder %s74, %s75
    %p87 = scmp.eq.s32.totalorder %s18, 1
    %p88 = por %p86, %p87
    %p90 = scmp.ne.s32.totalorder %s75, %s89
    %p91 = scmp.eq.s32.totalorder %s18, 0
    %p92 = por %p90, %p91
    %s94 = sadd.s32 %s93, 1
    %p97 = scmp.eq.s32.totalorder %s12, 1
    %p98 = scmp.ne.s32.totalorder %s93, %s95
    %p99 = scmp.eq.s32.totalorder %s12, 0
    %p100 = por %p98, %p99
    %p101 = scmp.ne.s32.totalorder %s93, %s95
    %p102 = scmp.eq.s32.totalorder %s17, 1
    %p103 = por %p101, %p102
    %p104 = scmp.ne.s32.totalorder %s95, %s96
    %p105 = scmp.eq.s32.totalorder %s17, 0
    %p106 = por %p104, %p105
    %p107 = scmp.ne.s32.totalorder %s95, %s96
    %p108 = scmp.eq.s32.totalorder %s18, 1
    %p109 = por %p107, %p108
    %p111 = scmp.ne.s32.totalorder %s96, %s110
    %p112 = scmp.eq.s32.totalorder %s18, 0
    %p113 = por %p111, %p112
    %s115 = sadd.s32 %s114, 1
    %p118 = scmp.eq.s32.totalorder %s12, 1
    %p119 = scmp.ne.s32.totalorder %s114, %s116
    %p120 = scmp.eq.s32.totalorder %s12, 0
    %p121 = por %p119, %p120
    %p122 = scmp.ne.s32.totalorder %s114, %s116
    %p123 = scmp.eq.s32.totalorder %s17, 1
    %p124 = por %p122, %p123
    %p125 = scmp.ne.s32.totalorder %s116, %s117
    %p126 = scmp.eq.s32.totalorder %s17, 0
    %p127 = por %p125, %p126
    %p128 = scmp.ne.s32.totalorder %s116, %s117
    %p129 = scmp.eq.s32.totalorder %s18, 1
    %p130 = por %p128, %p129
    %p132 = scmp.ne.s32.totalorder %s117, %s131
    %p133 = scmp.eq.s32.totalorder %s18, 0
    %p134 = por %p132, %p133
    %s136 = sadd.s32 %s135, 1
    %p139 = scmp.eq.s32.totalorder %s12, 1
    %p140 = scmp.ne.s32.totalorder %s135, %s137
    %p141 = scmp.eq.s32.totalorder %s12, 0
    %p142 = por %p140, %p141
    %p143 = scmp.ne.s32.totalorder %s135, %s137
    %p144 = scmp.eq.s32.totalorder %s17, 1
    %p145 = por %p143, %p144
    %p146 = scmp.ne.s32.totalorder %s137, %s138
    %p147 = scmp.eq.s32.totalorder %s17, 0
    %p148 = por %p146, %p147
    %p149 = scmp.ne.s32.totalorder %s137, %s138
    %p150 = scmp.eq.s32.totalorder %s18, 1
    %p151 = por %p149, %p150
    %p153 = scmp.ne.s32.totalorder %s138, %s152
    %p154 = scmp.eq.s32.totalorder %s18, 0
    %p155 = por %p153, %p154
    %s156 = ssub.s32 %s12, %s19
    %p157 = scmp.eq.s32.totalorder %s156, 0
    %s159 = sadd.s32 %s158, 1
    %s160 = scalar_select %p157, %s158, %s159
    %p163 = pneg %p157
    %p164 = scmp.eq.s32.totalorder %s12, 1
    %p165 = por %p163, %p164
    %p166 = scmp.ne.s32.totalorder %s158, %s161
    %p167 = scmp.eq.s32.totalorder %s12, 0
    %p168 = por %p166, %p167
    %p169 = scmp.ne.s32.totalorder %s158, %s161
    %p170 = scmp.eq.s32.totalorder %s17, 1
    %p171 = por %p169, %p170
    %p172 = scmp.ne.s32.totalorder %s161, %s162
    %p173 = scmp.eq.s32.totalorder %s17, 0
    %p174 = por %p172, %p173
    %p175 = scmp.ne.s32.totalorder %s161, %s162
    %p176 = scmp.eq.s32.totalorder %s18, 1
    %p177 = por %p175, %p176
    %p179 = scmp.ne.s32.totalorder %s162, %s178
    %p180 = scmp.eq.s32.totalorder %s18, 0
    %p181 = por %p179, %p180
    %p182 = scmp.le.s32.totalorder 1, %s12
    %p183 = scmp.lt.s32.totalorder %s12, 3
    %p184 = pnand %p182, %p183
    %p185 = pneg %p184
    // Predicated region
    $region9: #{layer_norm_gru_cell.1} parent=5 // pred_check
      _
    $region10: #{layer_norm_gru_cell.1} parent=5 // pred_check_branch
      %187 = sbr.rel (%p184) target = $region12
    $region11: #{layer_norm_gru_cell.1} parent=5 // pred_region
      %s188 = ssub.s32 %s12, 1
      // Predicated region
      $region13: #{layer_norm_gru_cell.1} parent=11 // pred_check
        %p189 = pneg %p85
      $region14: #{layer_norm_gru_cell.1} parent=11 // pred_check_branch
        %191 = sbr.rel (%p189) target = $region16
      $region15: #{layer_norm_gru_cell.1} parent=11 // pred_region
        _
      $region16: #{layer_norm_gru_cell.1} parent=11 // pred_fallthru
        _
      // Predicated region
      $region17: #{layer_norm_gru_cell.1} parent=11 // pred_check
        %p192 = pneg %p106
      $region18: #{layer_norm_gru_cell.1} parent=11 // pred_check_branch
        %194 = sbr.rel (%p192) target = $region20
      $region19: #{layer_norm_gru_cell.1} parent=11 // pred_region
        _
      $region20: #{layer_norm_gru_cell.1} parent=11 // pred_fallthru
        _
      // Predicated region
      $region21: #{layer_norm_gru_cell.1} parent=11 // pred_check
        %p195 = pneg %p127
      $region22: #{layer_norm_gru_cell.1} parent=11 // pred_check_branch
        %197 = sbr.rel (%p195) target = $region24
      $region23: #{layer_norm_gru_cell.1} parent=11 // pred_region
        _
      $region24: #{layer_norm_gru_cell.1} parent=11 // pred_fallthru
        _
      // Predicated region
      $region25: #{layer_norm_gru_cell.1} parent=11 // pred_check
        %p198 = pneg %p148
      $region26: #{layer_norm_gru_cell.1} parent=11 // pred_check_branch
        %200 = sbr.rel (%p198) target = $region28
      $region27: #{layer_norm_gru_cell.1} parent=11 // pred_region
        _
      $region28: #{layer_norm_gru_cell.1} parent=11 // pred_fallthru
        _
    $region12: #{layer_norm_gru_cell.1} parent=5 // pred_fallthru
      _
    %p201 = scmp.lt.s32.totalorder %s12, 2
    // Predicated region
    $region29: #{layer_norm_gru_cell.1} parent=5 // pred_check
      %p202 = pneg %p201
    $region30: #{layer_norm_gru_cell.1} parent=5 // pred_check_branch
      %204 = sbr.rel (%p202) target = $region32
    $region31: #{layer_norm_gru_cell.1} parent=5 // pred_region
      // Predicated region
      $region33: #{layer_norm_gru_cell.1} parent=31 // pred_check
        %p205 = pneg %p32
      $region34: #{layer_norm_gru_cell.1} parent=31 // pred_check_branch
        %207 = sbr.rel (%p205) target = $region36
      $region35: #{layer_norm_gru_cell.1} parent=31 // pred_region
        %s208 = smul.u32 16, %s12
        %p209 = scmp.lt.s32.totalorder %s208, 31
        %s210 = scalar_select %p209, %s208, 31
        %s211 = smul.addr %s210, 8
        %s212 = scalar_lea.vmem %s0, %s211
        %s213 = smul.u32 16, %s12
      $region36: #{layer_norm_gru_cell.1} parent=31 // pred_fallthru
        _
      // Predicated region
      $region37: #{layer_norm_gru_cell.1} parent=31 // pred_check
        %p214 = pneg %p58
      $region38: #{layer_norm_gru_cell.1} parent=31 // pred_check_branch
        %216 = sbr.rel (%p214) target = $region40
      $region39: #{layer_norm_gru_cell.1} parent=31 // pred_region
        %s217 = smul.u32 16, %s12
        %p218 = scmp.lt.s32.totalorder %s217, 31
        %s219 = scalar_select %p218, %s217, 31
        %s220 = smul.addr %s219, 8
        %s221 = scalar_lea.vmem %s1, %s220
        %s222 = smul.u32 16, %s12
      $region40: #{layer_norm_gru_cell.1} parent=31 // pred_fallthru
        _
    $region32: #{layer_norm_gru_cell.1} parent=5 // pred_fallthru
      _
    %p223 = scmp.le.s32.totalorder 1, %s12
    %p224 = scmp.lt.s32.totalorder %s12, 3
    %p225 = pnand %p223, %p224
    %p226 = pneg %p225
    // Predicated region
    $region41: #{layer_norm_gru_cell.1} parent=5 // pred_check
      _
    $region42: #{layer_norm_gru_cell.1} parent=5 // pred_check_branch
      %228 = sbr.rel (%p225) target = $region44
    $region43: #{layer_norm_gru_cell.1} parent=5 // pred_region
      %s229 = ssub.s32 %s12, 1
      %s230 = smul.u32 16, %s17
      %p231 = scmp.lt.s32.totalorder %s230, 31
      %s232 = scalar_select %p231, %s230, 31
      %s233 = smul.addr %s232, 8
      %s234 = scalar_lea.vmem %s0, %s233
      %p235 = pneg %p38
      %p236 = pneg %p35
      %s237 = smul.u32 16, %s17
      %p238 = scmp.lt.s32.totalorder %s237, 31
      %s239 = scalar_select %p238, %s237, 31
      %s240 = smul.addr %s239, 8
      %s241 = scalar_lea.vmem %s1, %s240
      %p242 = pneg %p64
      %p243 = pneg %p61
      %p244 = pneg %p85
      %p245 = pneg %p82
      %p246 = pneg %p106
      %p247 = pneg %p103
      %p248 = pneg %p127
      %p249 = pneg %p124
      %p250 = pneg %p148
      %p251 = pneg %p145
      %p252 = pneg %p174
      %p253 = pneg %p171
      %s254 = smul.u32 16, %s17
      %p255 = scmp.lt.s32.totalorder %s254, 31
      %s256 = scalar_select %p255, %s254, 31
      %s257 = smul.addr %s256, 8
      %s258 = scalar_lea.vmem %s6, %s257
      %s259 = smul.u32 16, %s17
      %p260 = scmp.lt.s32.totalorder %s259, 31
      %s261 = scalar_select %p260, %s259, 31
      %s262 = smul.addr %s261, 8
      %s263 = scalar_lea.vmem %s0, %s262
      %s264 = smul.u32 16, %s17
      %s265 = smul.u32 16, %s17
      %p266 = scmp.lt.s32.totalorder %s265, 31
      %s267 = scalar_select %p266, %s265, 31
      %s268 = smul.addr %s267, 8
      %s269 = scalar_lea.vmem %s1, %s268
      %s270 = smul.u32 16, %s17
      %s271 = smul.u32 16, %s17
      %p272 = scmp.lt.s32.totalorder %s271, 31
      %s273 = scalar_select %p272, %s271, 31
      %s274 = smul.addr %s273, 8
      %s275 = scalar_lea.vmem %s6, %s274
      %s276 = smul.u32 16, %s17
      %v278 = vlaneseq
      %v279 = vand.u32 %v278, 127
      %vm280 = vcmp.lt.s32.totalorder %v279, 32
      %v281 = vadd.s32 %v279, 128
      %vm282 = vcmp.lt.s32.totalorder %v279, 0
      %v283 = vsub.s32 0, %v279
      %v284 = vsel %vm282, %v283, %v279
      %v285 = vshrl.u32 %v284, 7
      %v286 = vand.u32 %v284, 127
      %v287 = vsub.s32 0, %v286
      %v288 = vsel %vm282, %v287, %v286
      %vm289 = vcmp.lt.s32.totalorder %v281, 0
      %v290 = vsub.s32 0, %v281
      %v291 = vsel %vm289, %v290, %v281
      %v292 = vshrl.u32 %v291, 7
      %v293 = vand.u32 %v291, 127
      %v294 = vsub.s32 0, %v293
      %v295 = vsel %vm289, %v294, %v293
      %vm296 = vcmp.ne.s32.totalorder %v288, 0
      %vm297 = vcmp.ne.s32.totalorder %v295, 0
      %vm298 = vcmp.lt.s32.totalorder %v288, 0
      %vm299 = vcmp.lt.s32.totalorder %v295, 0
      %vm300 = vmand %vm298, %vm296
      %vm301 = vmand %vm299, %vm297
      %v302 = vadd.s32 %v288, 128
      %v303 = vadd.s32 %v295, 128
      %v304 = vsel %vm300, %v302, %v288
      %v305 = vsel %vm301, %v303, %v295
      %vm306 = vcmp.lt.s32.totalorder %v304, 32
      %vm307 = vcmp.lt.s32.totalorder %v305, 32
      %v308 = vld [vmem:[%s263] sm:$0xff]
      %v309 = vld [vmem:[%s263 + $0x8] sm:$0xff]
      %v310 = vld [vmem:[%s263 + $0x10] sm:$0xff]
      %v311 = vld [vmem:[%s263 + $0x18] sm:$0xff]
      %v312 = vld [vmem:[%s263 + $0x20] sm:$0xff]
      %v313 = vld [vmem:[%s263 + $0x28] sm:$0xff]
      %v314 = vld [vmem:[%s263 + $0x30] sm:$0xff]
      %v315 = vld [vmem:[%s263 + $0x38] sm:$0xff]
      %v316 = vld [vmem:[%s263 + $0x40] sm:$0xff]
      %v317 = vld [vmem:[%s263 + $0x48] sm:$0xff]
      %v318 = vld [vmem:[%s263 + $0x50] sm:$0xff]
      %v319 = vld [vmem:[%s263 + $0x58] sm:$0xff]
      %v320 = vld [vmem:[%s263 + $0x60] sm:$0xff]
      %v321 = vld [vmem:[%s263 + $0x68] sm:$0xff]
      %v322 = vld [vmem:[%s263 + $0x70] sm:$0xff]
      %v323 = vld [vmem:[%s263 + $0x78] sm:$0xff]
      %v324 = vpack.c.bf16 %v309, %v308
      %v325 = vpack.c.bf16 %v311, %v310
      %v326 = vpack.c.bf16 %v313, %v312
      %v327 = vpack.c.bf16 %v315, %v314
      %v328 = vpack.c.bf16 %v317, %v316
      %v329 = vpack.c.bf16 %v319, %v318
      %v330 = vpack.c.bf16 %v321, %v320
      %v331 = vpack.c.bf16 %v323, %v322
      %v332 = vld [vmem:[%s269] sm:$0xff]
      %v333 = vld [vmem:[%s269 + $0x8] sm:$0xff]
      %v334 = vld [vmem:[%s269 + $0x10] sm:$0xff]
      %v335 = vld [vmem:[%s269 + $0x18] sm:$0xff]
      %v336 = vld [vmem:[%s269 + $0x20] sm:$0xff]
      %v337 = vld [vmem:[%s269 + $0x28] sm:$0xff]
      %v338 = vld [vmem:[%s269 + $0x30] sm:$0xff]
      %v339 = vld [vmem:[%s269 + $0x38] sm:$0xff]
      %v340 = vld [vmem:[%s269 + $0x40] sm:$0xff]
      %v341 = vld [vmem:[%s269 + $0x48] sm:$0xff]
      %v342 = vld [vmem:[%s269 + $0x50] sm:$0xff]
      %v343 = vld [vmem:[%s269 + $0x58] sm:$0xff]
      %v344 = vld [vmem:[%s269 + $0x60] sm:$0xff]
      %v345 = vld [vmem:[%s269 + $0x68] sm:$0xff]
      %v346 = vld [vmem:[%s269 + $0x70] sm:$0xff]
      %v347 = vld [vmem:[%s269 + $0x78] sm:$0xff]
      %v348 = vpack.c.bf16 %v333, %v332
      %v349 = vpack.c.bf16 %v335, %v334
      %v350 = vpack.c.bf16 %v337, %v336
      %v351 = vpack.c.bf16 %v339, %v338
      %v352 = vpack.c.bf16 %v341, %v340
      %v353 = vpack.c.bf16 %v343, %v342
      %v354 = vpack.c.bf16 %v345, %v344
      %v355 = vpack.c.bf16 %v347, %v346
      %v356 = vld [vmem:[%s2] sm:$0xff]
      %v357 = vld [vmem:[%s2 + $0xc] sm:$0xff]
      %v358 = vld [vmem:[%s2 + $0x18] sm:$0xff]
      %v359 = vld [vmem:[%s2 + $0x24] sm:$0xff]
      %v360 = vld [vmem:[%s2 + $0x30] sm:$0xff]
      %v361 = vld [vmem:[%s2 + $0x3c] sm:$0xff]
      %v362 = vld [vmem:[%s2 + $0x48] sm:$0xff]
      %v363 = vld [vmem:[%s2 + $0x54] sm:$0xff]
      %v364 = vld [vmem:[%s4] sm:$0x3]
      %v366 = vlaneseq
      %v367 = vshrl.u32 %v366, 7
      %v368 = vsub.s32 0, %v367
      %v369 = vrot.slane %v364, %v368
      %v370 = vlaneseq
      %v371 = vshrl.u32 %v370, 7
      %v372 = vsub.s32 1, %v371
      %v373 = vrot.slane %v364, %v372
      %v384 = vunpack.c.l.b16 %v356
      %v385 = vunpack.c.h.b16 %v356
      %v386 = vunpack.c.l.b16 %v357
      %v387 = vunpack.c.h.b16 %v357
      %v388 = vunpack.c.l.b16 %v358
      %v389 = vunpack.c.h.b16 %v358
      %v390 = vunpack.c.l.b16 %v359
      %v391 = vunpack.c.h.b16 %v359
      %v392 = vunpack.c.l.b16 %v360
      %v393 = vunpack.c.h.b16 %v360
      %v394 = vunpack.c.l.b16 %v361
      %v395 = vunpack.c.h.b16 %v361
      %v396 = vunpack.c.l.b16 %v362
      %v397 = vunpack.c.h.b16 %v362
      %v398 = vunpack.c.l.b16 %v363
      %v399 = vunpack.c.h.b16 %v363
      %v400 = vpack.c.b16 %v386, %v384
      %v401 = vpack.c.b16 %v387, %v385
      %v402 = vpack.c.b16 %v390, %v388
      %v403 = vpack.c.b16 %v391, %v389
      %v404 = vpack.c.b16 %v394, %v392
      %v405 = vpack.c.b16 %v395, %v393
      %v406 = vpack.c.b16 %v398, %v396
      %v407 = vpack.c.b16 %v399, %v397
      %vm416 = vcmask 523264
      %v418 = vsel %vm416, %v324, 0
      %v421 = vsel %vm416, %v325, 0
      %v424 = vsel %vm416, %v326, 0
      %v427 = vsel %vm416, %v327, 0
      %v430 = vsel %vm416, %v328, 0
      %v433 = vsel %vm416, %v329, 0
      %v436 = vsel %vm416, %v330, 0
      %v439 = vsel %vm416, %v331, 0
      %441 = vmatprep.subr.bf16.mxu0 %v401
      %442 = vmatpush1.bf16.msra.mxu0 %v400
      %443 = vmatprep.subr.bf16.mxu0 %v403
      %444 = vmatpush1.bf16.msra.mxu0 %v402
      %445 = vmatprep.subr.bf16.mxu0 %v405
      %446 = vmatpush1.bf16.msra.mxu0 %v404
      %447 = vmatprep.subr.bf16.mxu0 %v407
      %448 = vmatpush1.bf16.msra.mxu0 %v406
      %449 = vmatprep.subr.bf16.mxu0 0
      %450 = vmatpush1.bf16.msra.mxu0 0
      %451 = vmatprep.subr.bf16.mxu0 0
      %452 = vmatpush1.bf16.msra.mxu0 0
      %453 = vmatprep.subr.bf16.mxu0 0
      %454 = vmatpush1.bf16.msra.mxu0 0
      %455 = vmatprep.subr.bf16.mxu0 0
      %456 = vmatpush1.bf16.msra.mxu0 0
      %457 = vmatprep.subr.bf16.mxu0 0
      %458 = vmatpush1.bf16.msra.mxu0 0
      %459 = vmatprep.subr.bf16.mxu0 0
      %460 = vmatpush1.bf16.msra.mxu0 0
      %461 = vmatprep.subr.bf16.mxu0 0
      %462 = vmatpush1.bf16.msra.mxu0 0
      %463 = vmatprep.subr.bf16.mxu0 0
      %464 = vmatpush1.bf16.msra.mxu0 0
      %465 = vmatprep.subr.bf16.mxu0 0
      %466 = vmatpush1.bf16.msra.mxu0 0
      %467 = vmatprep.subr.bf16.mxu0 0
      %468 = vmatpush1.bf16.msra.mxu0 0
      %469 = vmatprep.subr.bf16.mxu0 0
      %470 = vmatpush1.bf16.msra.mxu0 0
      %471 = vmatprep.subr.bf16.mxu0 0
      %472 = vmatpush1.bf16.msra.mxu0 0
      %473 = vmatprep.mubr.bf16.mxu0 0
      %474 = vmatmul.mubr.bf16.gmra.mrb[0].mxu0 %v418
      %v475 = vpop.f32.mrb[0].mxu0
      %v476 = vadd.f32 %v369, %v475
      %v477 = vpop.f32.mrb[0].mxu0
      %v478 = vadd.f32 %v373, %v477
      %v479 = vpop.f32.mrb[0].mxu0
      %v480 = vadd.f32 %v369, %v479
      %v481 = vpop.f32.mrb[0].mxu0
      %v482 = vadd.f32 %v373, %v481
      %483 = vmatprep.mubr.bf16.mxu0 0
      %484 = vmatmul.mubr.bf16.gmra.mrb[0].mxu0 %v421
      %v485 = vpop.f32.mrb[0].mxu0
      %v486 = vadd.f32 %v369, %v485
      %v487 = vpop.f32.mrb[0].mxu0
      %v488 = vadd.f32 %v373, %v487
      %v489 = vpop.f32.mrb[0].mxu0
      %v490 = vadd.f32 %v369, %v489
      %v491 = vpop.f32.mrb[0].mxu0
      %v492 = vadd.f32 %v373, %v491
      %493 = vmatprep.mubr.bf16.mxu0 0
      %494 = vmatmul.mubr.bf16.gmra.mrb[0].mxu0 %v424
      %v495 = vpop.f32.mrb[0].mxu0
      %v496 = vadd.f32 %v369, %v495
      %v497 = vpop.f32.mrb[0].mxu0
      %v498 = vadd.f32 %v373, %v497
      %v499 = vpop.f32.mrb[0].mxu0
      %v500 = vadd.f32 %v369, %v499
      %v501 = vpop.f32.mrb[0].mxu0
      %v502 = vadd.f32 %v373, %v501
      %503 = vmatprep.mubr.bf16.mxu0 0
      %504 = vmatmul.mubr.bf16.gmra.mrb[0].mxu0 %v427
      %v505 = vpop.f32.mrb[0].mxu0
      %v506 = vadd.f32 %v369, %v505
      %v507 = vpop.f32.mrb[0].mxu0
      %v508 = vadd.f32 %v373, %v507
      %v509 = vpop.f32.mrb[0].mxu0
      %v510 = vadd.f32 %v369, %v509
      %v511 = vpop.f32.mrb[0].mxu0
      %v512 = vadd.f32 %v373, %v511
      %513 = vmatprep.mubr.bf16.mxu0 0
      %514 = vmatmul.mubr.bf16.gmra.mrb[0].mxu0 %v430
      %v515 = vpop.f32.mrb[0].mxu0
      %v516 = vadd.f32 %v369, %v515
      %v517 = vpop.f32.mrb[0].mxu0
      %v518 = vadd.f32 %v373, %v517
      %v519 = vpop.f32.mrb[0].mxu0
      %v520 = vadd.f32 %v369, %v519
      %v521 = vpop.f32.mrb[0].mxu0
      %v522 = vadd.f32 %v373, %v521
      %523 = vmatprep.mubr.bf16.mxu0 0
      %524 = vmatmul.mubr.bf16.gmra.mrb[0].mxu0 %v433
      %v525 = vpop.f32.mrb[0].mxu0
      %v526 = vadd.f32 %v369, %v525
      %v527 = vpop.f32.mrb[0].mxu0
      %v528 = vadd.f32 %v373, %v527
      %v529 = vpop.f32.mrb[0].mxu0
      %v530 = vadd.f32 %v369, %v529
      %v531 = vpop.f32.mrb[0].mxu0
      %v532 = vadd.f32 %v373, %v531
      %533 = vmatprep.mubr.bf16.mxu0 0
      %534 = vmatmul.mubr.bf16.gmra.mrb[0].mxu0 %v436
      %v535 = vpop.f32.mrb[0].mxu0
      %v536 = vadd.f32 %v369, %v535
      %v537 = vpop.f32.mrb[0].mxu0
      %v538 = vadd.f32 %v373, %v537
      %v539 = vpop.f32.mrb[0].mxu0
      %v540 = vadd.f32 %v369, %v539
      %v541 = vpop.f32.mrb[0].mxu0
      %v542 = vadd.f32 %v373, %v541
      %543 = vmatprep.mubr.bf16.mxu0 0
      %544 = vmatmul.mubr.bf16.gmra.mrb[0].mxu0 %v439
      %v545 = vpop.f32.mrb[0].mxu0
      %v546 = vadd.f32 %v369, %v545
      %v547 = vpop.f32.mrb[0].mxu0
      %v548 = vadd.f32 %v373, %v547
      %v549 = vpop.f32.mrb[0].mxu0
      %v550 = vadd.f32 %v369, %v549
      %v551 = vpop.f32.mrb[0].mxu0
      %v552 = vadd.f32 %v373, %v551
      %553 = vdwg.mxu0
      %v554 = vld [vmem:[%s3] sm:$0xff]
      %v555 = vld [vmem:[%s3 + $0xc] sm:$0xff]
      %v556 = vld [vmem:[%s3 + $0x18] sm:$0xff]
      %v557 = vld [vmem:[%s3 + $0x24] sm:$0xff]
      %v558 = vld [vmem:[%s3 + $0x30] sm:$0xff]
      %v559 = vld [vmem:[%s3 + $0x3c] sm:$0xff]
      %v560 = vld [vmem:[%s3 + $0x48] sm:$0xff]
      %v561 = vld [vmem:[%s3 + $0x54] sm:$0xff]
      %v562 = vld [vmem:[%s3 + $0x60] sm:$0xff]
      %v563 = vld [vmem:[%s3 + $0x6c] sm:$0xff]
      %v564 = vld [vmem:[%s3 + $0x78] sm:$0xff]
      %v565 = vld [vmem:[%s3 + $0x84] sm:$0xff]
      %v566 = vld [vmem:[%s3 + $0x90] sm:$0xff]
      %v567 = vld [vmem:[%s3 + $0x9c] sm:$0xff]
      %v568 = vld [vmem:[%s3 + $0xa8] sm:$0xff]
      %v569 = vld [vmem:[%s3 + $0xb4] sm:$0xff]
      %v570 = vld [vmem:[%s5] sm:$0x3]
      %v572 = vlaneseq
      %v573 = vshrl.u32 %v572, 7
      %v574 = vsub.s32 0, %v573
      %v575 = vrot.slane %v570, %v574
      %v576 = vlaneseq
      %v577 = vshrl.u32 %v576, 7
      %v578 = vsub.s32 1, %v577
      %v579 = vrot.slane %v570, %v578
      %v598 = vunpack.c.l.b16 %v554
      %v599 = vunpack.c.h.b16 %v554
      %v600 = vunpack.c.l.b16 %v555
      %v601 = vunpack.c.h.b16 %v555
      %v602 = vunpack.c.l.b16 %v556
      %v603 = vunpack.c.h.b16 %v556
      %v604 = vunpack.c.l.b16 %v557
      %v605 = vunpack.c.h.b16 %v557
      %v606 = vunpack.c.l.b16 %v558
      %v607 = vunpack.c.h.b16 %v558
      %v608 = vunpack.c.l.b16 %v559
      %v609 = vunpack.c.h.b16 %v559
      %v610 = vunpack.c.l.b16 %v560
      %v611 = vunpack.c.h.b16 %v560
      %v612 = vunpack.c.l.b16 %v561
      %v613 = vunpack.c.h.b16 %v561
      %v614 = vunpack.c.l.b16 %v562
      %v615 = vunpack.c.h.b16 %v562
      %v616 = vunpack.c.l.b16 %v563
      %v617 = vunpack.c.h.b16 %v563
      %v618 = vunpack.c.l.b16 %v564
      %v619 = vunpack.c.h.b16 %v564
      %v620 = vunpack.c.l.b16 %v565
      %v621 = vunpack.c.h.b16 %v565
      %v622 = vunpack.c.l.b16 %v566
      %v623 = vunpack.c.h.b16 %v566
      %v624 = vunpack.c.l.b16 %v567
      %v625 = vunpack.c.h.b16 %v567
      %v626 = vunpack.c.l.b16 %v568
      %v627 = vunpack.c.h.b16 %v568
      %v628 = vunpack.c.l.b16 %v569
      %v629 = vunpack.c.h.b16 %v569
      %v630 = vpack.c.b16 %v600, %v598
      %v631 = vpack.c.b16 %v601, %v599
      %v632 = vpack.c.b16 %v604, %v602
      %v633 = vpack.c.b16 %v605, %v603
      %v634 = vpack.c.b16 %v608, %v606
      %v635 = vpack.c.b16 %v609, %v607
      %v636 = vpack.c.b16 %v612, %v610
      %v637 = vpack.c.b16 %v613, %v611
      %v638 = vpack.c.b16 %v616, %v614
      %v639 = vpack.c.b16 %v617, %v615
      %v640 = vpack.c.b16 %v620, %v618
      %v641 = vpack.c.b16 %v621, %v619
      %v642 = vpack.c.b16 %v624, %v622
      %v643 = vpack.c.b16 %v625, %v623
      %v644 = vpack.c.b16 %v628, %v626
      %v645 = vpack.c.b16 %v629, %v627
      %662 = vmatprep.subr.bf16.mxu0 %v631
      %663 = vmatpush1.bf16.msra.mxu0 %v630
      %664 = vmatprep.subr.bf16.mxu0 %v633
      %665 = vmatpush1.bf16.msra.mxu0 %v632
      %666 = vmatprep.subr.bf16.mxu0 %v635
      %667 = vmatpush1.bf16.msra.mxu0 %v634
      %668 = vmatprep.subr.bf16.mxu0 %v637
      %669 = vmatpush1.bf16.msra.mxu0 %v636
      %670 = vmatprep.subr.bf16.mxu0 %v639
      %671 = vmatpush1.bf16.msra.mxu0 %v638
      %672 = vmatprep.subr.bf16.mxu0 %v641
      %673 = vmatpush1.bf16.msra.mxu0 %v640
      %674 = vmatprep.subr.bf16.mxu0 %v643
      %675 = vmatpush1.bf16.msra.mxu0 %v642
      %676 = vmatprep.subr.bf16.mxu0 %v645
      %677 = vmatpush1.bf16.msra.mxu0 %v644
      %678 = vmatprep.subr.bf16.mxu0 0
      %679 = vmatpush1.bf16.msra.mxu0 0
      %680 = vmatprep.subr.bf16.mxu0 0
      %681 = vmatpush1.bf16.msra.mxu0 0
      %682 = vmatprep.subr.bf16.mxu0 0
      %683 = vmatpush1.bf16.msra.mxu0 0
      %684 = vmatprep.subr.bf16.mxu0 0
      %685 = vmatpush1.bf16.msra.mxu0 0
      %686 = vmatprep.subr.bf16.mxu0 0
      %687 = vmatpush1.bf16.msra.mxu0 0
      %688 = vmatprep.subr.bf16.mxu0 0
      %689 = vmatpush1.bf16.msra.mxu0 0
      %690 = vmatprep.subr.bf16.mxu0 0
      %691 = vmatpush1.bf16.msra.mxu0 0
      %692 = vmatprep.subr.bf16.mxu0 0
      %693 = vmatpush1.bf16.msra.mxu0 0
      %694 = vmatprep.mubr.bf16.mxu0 0
      %695 = vmatmul.mubr.bf16.gmra.mrb[0].mxu0 %v348
      %v696 = vpop.f32.mrb[0].mxu0
      %v697 = vadd.f32 %v575, %v696
      %v698 = vpop.f32.mrb[0].mxu0
      %v699 = vadd.f32 %v579, %v698
      %v700 = vpop.f32.mrb[0].mxu0
      %v701 = vadd.f32 %v575, %v700
      %v702 = vpop.f32.mrb[0].mxu0
      %v703 = vadd.f32 %v579, %v702
      %704 = vmatprep.mubr.bf16.mxu0 0
      %705 = vmatmul.mubr.bf16.gmra.mrb[0].mxu0 %v349
      %v706 = vpop.f32.mrb[0].mxu0
      %v707 = vadd.f32 %v575, %v706
      %v708 = vpop.f32.mrb[0].mxu0
      %v709 = vadd.f32 %v579, %v708
      %v710 = vpop.f32.mrb[0].mxu0
      %v711 = vadd.f32 %v575, %v710
      %v712 = vpop.f32.mrb[0].mxu0
      %v713 = vadd.f32 %v579, %v712
      %714 = vmatprep.mubr.bf16.mxu0 0
      %715 = vmatmul.mubr.bf16.gmra.mrb[0].mxu0 %v350
      %v716 = vpop.f32.mrb[0].mxu0
      %v717 = vadd.f32 %v575, %v716
      %v718 = vpop.f32.mrb[0].mxu0
      %v719 = vadd.f32 %v579, %v718
      %v720 = vpop.f32.mrb[0].mxu0
      %v721 = vadd.f32 %v575, %v720
      %v722 = vpop.f32.mrb[0].mxu0
      %v723 = vadd.f32 %v579, %v722
      %724 = vmatprep.mubr.bf16.mxu0 0
      %725 = vmatmul.mubr.bf16.gmra.mrb[0].mxu0 %v351
      %v726 = vpop.f32.mrb[0].mxu0
      %v727 = vadd.f32 %v575, %v726
      %v728 = vpop.f32.mrb[0].mxu0
      %v729 = vadd.f32 %v579, %v728
      %v730 = vpop.f32.mrb[0].mxu0
      %v731 = vadd.f32 %v575, %v730
      %v732 = vpop.f32.mrb[0].mxu0
      %v733 = vadd.f32 %v579, %v732
      %734 = vmatprep.mubr.bf16.mxu0 0
      %735 = vmatmul.mubr.bf16.gmra.mrb[0].mxu0 %v352
      %v736 = vpop.f32.mrb[0].mxu0
      %v737 = vadd.f32 %v575, %v736
      %v738 = vpop.f32.mrb[0].mxu0
      %v739 = vadd.f32 %v579, %v738
      %v740 = vpop.f32.mrb[0].mxu0
      %v741 = vadd.f32 %v575, %v740
      %v742 = vpop.f32.mrb[0].mxu0
      %v743 = vadd.f32 %v579, %v742
      %744 = vmatprep.mubr.bf16.mxu0 0
      %745 = vmatmul.mubr.bf16.gmra.mrb[0].mxu0 %v353
      %v746 = vpop.f32.mrb[0].mxu0
      %v747 = vadd.f32 %v575, %v746
      %v748 = vpop.f32.mrb[0].mxu0
      %v749 = vadd.f32 %v579, %v748
      %v750 = vpop.f32.mrb[0].mxu0
      %v751 = vadd.f32 %v575, %v750
      %v752 = vpop.f32.mrb[0].mxu0
      %v753 = vadd.f32 %v579, %v752
      %754 = vmatprep.mubr.bf16.mxu0 0
      %755 = vmatmul.mubr.bf16.gmra.mrb[0].mxu0 %v354
      %v756 = vpop.f32.mrb[0].mxu0
      %v757 = vadd.f32 %v575, %v756
      %v758 = vpop.f32.mrb[0].mxu0
      %v759 = vadd.f32 %v579, %v758
      %v760 = vpop.f32.mrb[0].mxu0
      %v761 = vadd.f32 %v575, %v760
      %v762 = vpop.f32.mrb[0].mxu0
      %v763 = vadd.f32 %v579, %v762
      %764 = vmatprep.mubr.bf16.mxu0 0
      %765 = vmatmul.mubr.bf16.gmra.mrb[0].mxu0 %v355
      %v766 = vpop.f32.mrb[0].mxu0
      %v767 = vadd.f32 %v575, %v766
      %v768 = vpop.f32.mrb[0].mxu0
      %v769 = vadd.f32 %v579, %v768
      %v770 = vpop.f32.mrb[0].mxu0
      %v771 = vadd.f32 %v575, %v770
      %v772 = vpop.f32.mrb[0].mxu0
      %v773 = vadd.f32 %v579, %v772
      %774 = vdwg.mxu0
      %v775 = vadd.f32 %v476, %v478
      %776 = vadd.xlane.f32.xlu0 %v775
      %v777 = vpop.xlane.xlu0 %776
      %v778 = vadd.f32 %v480, %v482
      %779 = vadd.xlane.f32.xlu0 %v778
      %v780 = vpop.xlane.xlu0 %779
      %v781 = vadd.f32 %v486, %v488
      %782 = vadd.xlane.f32.xlu0 %v781
      %v783 = vpop.xlane.xlu0 %782
      %v784 = vadd.f32 %v490, %v492
      %785 = vadd.xlane.f32.xlu0 %v784
      %v786 = vpop.xlane.xlu0 %785
      %v787 = vadd.f32 %v496, %v498
      %788 = vadd.xlane.f32.xlu0 %v787
      %v789 = vpop.xlane.xlu0 %788
      %v790 = vadd.f32 %v500, %v502
      %791 = vadd.xlane.f32.xlu0 %v790
      %v792 = vpop.xlane.xlu0 %791
      %v793 = vadd.f32 %v506, %v508
      %794 = vadd.xlane.f32.xlu0 %v793
      %v795 = vpop.xlane.xlu0 %794
      %v796 = vadd.f32 %v510, %v512
      %797 = vadd.xlane.f32.xlu0 %v796
      %v798 = vpop.xlane.xlu0 %797
      %v799 = vadd.f32 %v516, %v518
      %800 = vadd.xlane.f32.xlu0 %v799
      %v801 = vpop.xlane.xlu0 %800
      %v802 = vadd.f32 %v520, %v522
      %803 = vadd.xlane.f32.xlu0 %v802
      %v804 = vpop.xlane.xlu0 %803
      %v805 = vadd.f32 %v526, %v528
      %806 = vadd.xlane.f32.xlu0 %v805
      %v807 = vpop.xlane.xlu0 %806
      %v808 = vadd.f32 %v530, %v532
      %809 = vadd.xlane.f32.xlu0 %v808
      %v810 = vpop.xlane.xlu0 %809
      %v811 = vadd.f32 %v536, %v538
      %812 = vadd.xlane.f32.xlu0 %v811
      %v813 = vpop.xlane.xlu0 %812
      %v814 = vadd.f32 %v540, %v542
      %815 = vadd.xlane.f32.xlu0 %v814
      %v816 = vpop.xlane.xlu0 %815
      %v817 = vadd.f32 %v546, %v548
      %818 = vadd.xlane.f32.xlu0 %v817
      %v819 = vpop.xlane.xlu0 %818
      %v820 = vadd.f32 %v550, %v552
      %821 = vadd.xlane.f32.xlu0 %v820
      %v822 = vpop.xlane.xlu0 %821
      %v823 = vmul.f32 %v777, 0.015625
      %v824 = vmul.f32 %v780, 0.015625
      %v825 = vmul.f32 %v783, 0.015625
      %v826 = vmul.f32 %v786, 0.015625
      %v827 = vmul.f32 %v789, 0.015625
      %v828 = vmul.f32 %v792, 0.015625
      %v829 = vmul.f32 %v795, 0.015625
      %v830 = vmul.f32 %v798, 0.015625
      %v831 = vmul.f32 %v801, 0.015625
      %v832 = vmul.f32 %v804, 0.015625
      %v833 = vmul.f32 %v807, 0.015625
      %v834 = vmul.f32 %v810, 0.015625
      %v835 = vmul.f32 %v813, 0.015625
      %v836 = vmul.f32 %v816, 0.015625
      %v837 = vmul.f32 %v819, 0.015625
      %v838 = vmul.f32 %v822, 0.015625
      %v839 = vsub.f32 %v476, %v823
      %v840 = vsub.f32 %v478, %v823
      %v841 = vsub.f32 %v480, %v824
      %v842 = vsub.f32 %v482, %v824
      %v843 = vsub.f32 %v486, %v825
      %v844 = vsub.f32 %v488, %v825
      %v845 = vsub.f32 %v490, %v826
      %v846 = vsub.f32 %v492, %v826
      %v847 = vsub.f32 %v496, %v827
      %v848 = vsub.f32 %v498, %v827
      %v849 = vsub.f32 %v500, %v828
      %v850 = vsub.f32 %v502, %v828
      %v851 = vsub.f32 %v506, %v829
      %v852 = vsub.f32 %v508, %v829
      %v853 = vsub.f32 %v510, %v830
      %v854 = vsub.f32 %v512, %v830
      %v855 = vsub.f32 %v516, %v831
      %v856 = vsub.f32 %v518, %v831
      %v857 = vsub.f32 %v520, %v832
      %v858 = vsub.f32 %v522, %v832
      %v859 = vsub.f32 %v526, %v833
      %v860 = vsub.f32 %v528, %v833
      %v861 = vsub.f32 %v530, %v834
      %v862 = vsub.f32 %v532, %v834
      %v863 = vsub.f32 %v536, %v835
      %v864 = vsub.f32 %v538, %v835
      %v865 = vsub.f32 %v540, %v836
      %v866 = vsub.f32 %v542, %v836
      %v867 = vsub.f32 %v546, %v837
      %v868 = vsub.f32 %v548, %v837
      %v869 = vsub.f32 %v550, %v838
      %v870 = vsub.f32 %v552, %v838
      %v871 = vsel %vm306, 1, 0
      %v872 = vsel %vm307, 1, 0
      %vm873 = vcmp.eq.s32.totalorder %v871, 1
      %vm874 = vcmp.eq.s32.totalorder %v872, 1
      %v875 = vsel %vm873, %v839, 0.0
      %v876 = vsel %vm874, %v840, 0.0
      %v877 = vsel %vm873, %v841, 0.0
      %v878 = vsel %vm874, %v842, 0.0
      %v879 = vsel %vm873, %v843, 0.0
      %v880 = vsel %vm874, %v844, 0.0
      %v881 = vsel %vm873, %v845, 0.0
      %v882 = vsel %vm874, %v846, 0.0
      %v883 = vsel %vm873, %v847, 0.0
      %v884 = vsel %vm874, %v848, 0.0
      %v885 = vsel %vm873, %v849, 0.0
      %v886 = vsel %vm874, %v850, 0.0
      %v887 = vsel %vm873, %v851, 0.0
      %v888 = vsel %vm874, %v852, 0.0
      %v889 = vsel %vm873, %v853, 0.0
      %v890 = vsel %vm874, %v854, 0.0
      %v891 = vsel %vm873, %v855, 0.0
      %v892 = vsel %vm874, %v856, 0.0
      %v893 = vsel %vm873, %v857, 0.0
      %v894 = vsel %vm874, %v858, 0.0
      %v895 = vsel %vm873, %v859, 0.0
      %v896 = vsel %vm874, %v860, 0.0
      %v897 = vsel %vm873, %v861, 0.0
      %v898 = vsel %vm874, %v862, 0.0
      %v899 = vsel %vm873, %v863, 0.0
      %v900 = vsel %vm874, %v864, 0.0
      %v901 = vsel %vm873, %v865, 0.0
      %v902 = vsel %vm874, %v866, 0.0
      %v903 = vsel %vm873, %v867, 0.0
      %v904 = vsel %vm874, %v868, 0.0
      %v905 = vsel %vm873, %v869, 0.0
      %v906 = vsel %vm874, %v870, 0.0
      %v907 = vmul.f32 %v875, %v875
      %v908 = vmul.f32 %v876, %v876
      %v909 = vmul.f32 %v877, %v877
      %v910 = vmul.f32 %v878, %v878
      %v911 = vmul.f32 %v879, %v879
      %v912 = vmul.f32 %v880, %v880
      %v913 = vmul.f32 %v881, %v881
      %v914 = vmul.f32 %v882, %v882
      %v915 = vmul.f32 %v883, %v883
      %v916 = vmul.f32 %v884, %v884
      %v917 = vmul.f32 %v885, %v885
      %v918 = vmul.f32 %v886, %v886
      %v919 = vmul.f32 %v887, %v887
      %v920 = vmul.f32 %v888, %v888
      %v921 = vmul.f32 %v889, %v889
      %v922 = vmul.f32 %v890, %v890
      %v923 = vmul.f32 %v891, %v891
      %v924 = vmul.f32 %v892, %v892
      %v925 = vmul.f32 %v893, %v893
      %v926 = vmul.f32 %v894, %v894
      %v927 = vmul.f32 %v895, %v895
      %v928 = vmul.f32 %v896, %v896
      %v929 = vmul.f32 %v897, %v897
      %v930 = vmul.f32 %v898, %v898
      %v931 = vmul.f32 %v899, %v899
      %v932 = vmul.f32 %v900, %v900
      %v933 = vmul.f32 %v901, %v901
      %v934 = vmul.f32 %v902, %v902
      %v935 = vmul.f32 %v903, %v903
      %v936 = vmul.f32 %v904, %v904
      %v937 = vmul.f32 %v905, %v905
      %v938 = vmul.f32 %v906, %v906
      %v939 = vadd.f32 %v907, %v908
      %940 = vadd.xlane.f32.xlu0 %v939
      %v941 = vpop.xlane.xlu0 %940
      %v942 = vadd.f32 %v909, %v910
      %943 = vadd.xlane.f32.xlu0 %v942
      %v944 = vpop.xlane.xlu0 %943
      %v945 = vadd.f32 %v911, %v912
      %946 = vadd.xlane.f32.xlu0 %v945
      %v947 = vpop.xlane.xlu0 %946
      %v948 = vadd.f32 %v913, %v914
      %949 = vadd.xlane.f32.xlu0 %v948
      %v950 = vpop.xlane.xlu0 %949
      %v951 = vadd.f32 %v915, %v916
      %952 = vadd.xlane.f32.xlu0 %v951
      %v953 = vpop.xlane.xlu0 %952
      %v954 = vadd.f32 %v917, %v918
      %955 = vadd.xlane.f32.xlu0 %v954
      %v956 = vpop.xlane.xlu0 %955
      %v957 = vadd.f32 %v919, %v920
      %958 = vadd.xlane.f32.xlu0 %v957
      %v959 = vpop.xlane.xlu0 %958
      %v960 = vadd.f32 %v921, %v922
      %961 = vadd.xlane.f32.xlu0 %v960
      %v962 = vpop.xlane.xlu0 %961
      %v963 = vadd.f32 %v923, %v924
      %964 = vadd.xlane.f32.xlu0 %v963
      %v965 = vpop.xlane.xlu0 %964
      %v966 = vadd.f32 %v925, %v926
      %967 = vadd.xlane.f32.xlu0 %v966
      %v968 = vpop.xlane.xlu0 %967
      %v969 = vadd.f32 %v927, %v928
      %970 = vadd.xlane.f32.xlu0 %v969
      %v971 = vpop.xlane.xlu0 %970
      %v972 = vadd.f32 %v929, %v930
      %973 = vadd.xlane.f32.xlu0 %v972
      %v974 = vpop.xlane.xlu0 %973
      %v975 = vadd.f32 %v931, %v932
      %976 = vadd.xlane.f32.xlu0 %v975
      %v977 = vpop.xlane.xlu0 %976
      %v978 = vadd.f32 %v933, %v934
      %979 = vadd.xlane.f32.xlu0 %v978
      %v980 = vpop.xlane.xlu0 %979
      %v981 = vadd.f32 %v935, %v936
      %982 = vadd.xlane.f32.xlu0 %v981
      %v983 = vpop.xlane.xlu0 %982
      %v984 = vadd.f32 %v937, %v938
      %985 = vadd.xlane.f32.xlu0 %v984
      %v986 = vpop.xlane.xlu0 %985
      %v987 = vmul.f32 %v941, 0.015625
      %v988 = vmul.f32 %v944, 0.015625
      %v989 = vmul.f32 %v947, 0.015625
      %v990 = vmul.f32 %v950, 0.015625
      %v991 = vmul.f32 %v953, 0.015625
      %v992 = vmul.f32 %v956, 0.015625
      %v993 = vmul.f32 %v959, 0.015625
      %v994 = vmul.f32 %v962, 0.015625
      %v995 = vmul.f32 %v965, 0.015625
      %v996 = vmul.f32 %v968, 0.015625
      %v997 = vmul.f32 %v971, 0.015625
      %v998 = vmul.f32 %v974, 0.015625
      %v999 = vmul.f32 %v977, 0.015625
      %v1000 = vmul.f32 %v980, 0.015625
      %v1001 = vmul.f32 %v983, 0.015625
      %v1002 = vmul.f32 %v986, 0.015625
      %v1003 = vadd.f32 %v987, 1e-05
      %v1004 = vadd.f32 %v988, 1e-05
      %v1005 = vadd.f32 %v989, 1e-05
      %v1006 = vadd.f32 %v990, 1e-05
      %v1007 = vadd.f32 %v991, 1e-05
      %v1008 = vadd.f32 %v992, 1e-05
      %v1009 = vadd.f32 %v993, 1e-05
      %v1010 = vadd.f32 %v994, 1e-05
      %v1011 = vadd.f32 %v995, 1e-05
      %v1012 = vadd.f32 %v996, 1e-05
      %v1013 = vadd.f32 %v997, 1e-05
      %v1014 = vadd.f32 %v998, 1e-05
      %v1015 = vadd.f32 %v999, 1e-05
      %v1016 = vadd.f32 %v1000, 1e-05
      %v1017 = vadd.f32 %v1001, 1e-05
      %v1018 = vadd.f32 %v1002, 1e-05
      %v1019 = vrsqrt.pop %v1003
      %v1020 = vrsqrt.pop %v1004
      %v1021 = vrsqrt.pop %v1005
      %v1022 = vrsqrt.pop %v1006
      %v1023 = vrsqrt.pop %v1007
      %v1024 = vrsqrt.pop %v1008
      %v1025 = vrsqrt.pop %v1009
      %v1026 = vrsqrt.pop %v1010
      %v1027 = vrsqrt.pop %v1011
      %v1028 = vrsqrt.pop %v1012
      %v1029 = vrsqrt.pop %v1013
      %v1030 = vrsqrt.pop %v1014
      %v1031 = vrsqrt.pop %v1015
      %v1032 = vrsqrt.pop %v1016
      %v1033 = vrsqrt.pop %v1017
      %v1034 = vrsqrt.pop %v1018
      %v1035 = vmul.f32 %v875, %v1019
      %v1036 = vmul.f32 %v876, %v1019
      %v1037 = vmul.f32 %v877, %v1020
      %v1038 = vmul.f32 %v878, %v1020
      %v1039 = vmul.f32 %v879, %v1021
      %v1040 = vmul.f32 %v880, %v1021
      %v1041 = vmul.f32 %v881, %v1022
      %v1042 = vmul.f32 %v882, %v1022
      %v1043 = vmul.f32 %v883, %v1023
      %v1044 = vmul.f32 %v884, %v1023
      %v1045 = vmul.f32 %v885, %v1024
      %v1046 = vmul.f32 %v886, %v1024
      %v1047 = vmul.f32 %v887, %v1025
      %v1048 = vmul.f32 %v888, %v1025
      %v1049 = vmul.f32 %v889, %v1026
      %v1050 = vmul.f32 %v890, %v1026
      %v1051 = vmul.f32 %v891, %v1027
      %v1052 = vmul.f32 %v892, %v1027
      %v1053 = vmul.f32 %v893, %v1028
      %v1054 = vmul.f32 %v894, %v1028
      %v1055 = vmul.f32 %v895, %v1029
      %v1056 = vmul.f32 %v896, %v1029
      %v1057 = vmul.f32 %v897, %v1030
      %v1058 = vmul.f32 %v898, %v1030
      %v1059 = vmul.f32 %v899, %v1031
      %v1060 = vmul.f32 %v900, %v1031
      %v1061 = vmul.f32 %v901, %v1032
      %v1062 = vmul.f32 %v902, %v1032
      %v1063 = vmul.f32 %v903, %v1033
      %v1064 = vmul.f32 %v904, %v1033
      %v1065 = vmul.f32 %v905, %v1034
      %v1066 = vmul.f32 %v906, %v1034
      %v1067 = vadd.f32 %v697, %v699
      %1068 = vadd.xlane.f32.xlu0 %v1067
      %v1069 = vpop.xlane.xlu0 %1068
      %v1070 = vadd.f32 %v701, %v703
      %1071 = vadd.xlane.f32.xlu0 %v1070
      %v1072 = vpop.xlane.xlu0 %1071
      %v1073 = vadd.f32 %v707, %v709
      %1074 = vadd.xlane.f32.xlu0 %v1073
      %v1075 = vpop.xlane.xlu0 %1074
      %v1076 = vadd.f32 %v711, %v713
      %1077 = vadd.xlane.f32.xlu0 %v1076
      %v1078 = vpop.xlane.xlu0 %1077
      %v1079 = vadd.f32 %v717, %v719
      %1080 = vadd.xlane.f32.xlu0 %v1079
      %v1081 = vpop.xlane.xlu0 %1080
      %v1082 = vadd.f32 %v721, %v723
      %1083 = vadd.xlane.f32.xlu0 %v1082
      %v1084 = vpop.xlane.xlu0 %1083
      %v1085 = vadd.f32 %v727, %v729
      %1086 = vadd.xlane.f32.xlu0 %v1085
      %v1087 = vpop.xlane.xlu0 %1086
      %v1088 = vadd.f32 %v731, %v733
      %1089 = vadd.xlane.f32.xlu0 %v1088
      %v1090 = vpop.xlane.xlu0 %1089
      %v1091 = vadd.f32 %v737, %v739
      %1092 = vadd.xlane.f32.xlu0 %v1091
      %v1093 = vpop.xlane.xlu0 %1092
      %v1094 = vadd.f32 %v741, %v743
      %1095 = vadd.xlane.f32.xlu0 %v1094
      %v1096 = vpop.xlane.xlu0 %1095
      %v1097 = vadd.f32 %v747, %v749
      %1098 = vadd.xlane.f32.xlu0 %v1097
      %v1099 = vpop.xlane.xlu0 %1098
      %v1100 = vadd.f32 %v751, %v753
      %1101 = vadd.xlane.f32.xlu0 %v1100
      %v1102 = vpop.xlane.xlu0 %1101
      %v1103 = vadd.f32 %v757, %v759
      %1104 = vadd.xlane.f32.xlu0 %v1103
      %v1105 = vpop.xlane.xlu0 %1104
      %v1106 = vadd.f32 %v761, %v763
      %1107 = vadd.xlane.f32.xlu0 %v1106
      %v1108 = vpop.xlane.xlu0 %1107
      %v1109 = vadd.f32 %v767, %v769
      %1110 = vadd.xlane.f32.xlu0 %v1109
      %v1111 = vpop.xlane.xlu0 %1110
      %v1112 = vadd.f32 %v771, %v773
      %1113 = vadd.xlane.f32.xlu0 %v1112
      %v1114 = vpop.xlane.xlu0 %1113
      %v1115 = vmul.f32 %v1069, 0.015625
      %v1116 = vmul.f32 %v1072, 0.015625
      %v1117 = vmul.f32 %v1075, 0.015625
      %v1118 = vmul.f32 %v1078, 0.015625
      %v1119 = vmul.f32 %v1081, 0.015625
      %v1120 = vmul.f32 %v1084, 0.015625
      %v1121 = vmul.f32 %v1087, 0.015625
      %v1122 = vmul.f32 %v1090, 0.015625
      %v1123 = vmul.f32 %v1093, 0.015625
      %v1124 = vmul.f32 %v1096, 0.015625
      %v1125 = vmul.f32 %v1099, 0.015625
      %v1126 = vmul.f32 %v1102, 0.015625
      %v1127 = vmul.f32 %v1105, 0.015625
      %v1128 = vmul.f32 %v1108, 0.015625
      %v1129 = vmul.f32 %v1111, 0.015625
      %v1130 = vmul.f32 %v1114, 0.015625
      %v1131 = vsub.f32 %v697, %v1115
      %v1132 = vsub.f32 %v699, %v1115
      %v1133 = vsub.f32 %v701, %v1116
      %v1134 = vsub.f32 %v703, %v1116
      %v1135 = vsub.f32 %v707, %v1117
      %v1136 = vsub.f32 %v709, %v1117
      %v1137 = vsub.f32 %v711, %v1118
      %v1138 = vsub.f32 %v713, %v1118
      %v1139 = vsub.f32 %v717, %v1119
      %v1140 = vsub.f32 %v719, %v1119
      %v1141 = vsub.f32 %v721, %v1120
      %v1142 = vsub.f32 %v723, %v1120
      %v1143 = vsub.f32 %v727, %v1121
      %v1144 = vsub.f32 %v729, %v1121
      %v1145 = vsub.f32 %v731, %v1122
      %v1146 = vsub.f32 %v733, %v1122
      %v1147 = vsub.f32 %v737, %v1123
      %v1148 = vsub.f32 %v739, %v1123
      %v1149 = vsub.f32 %v741, %v1124
      %v1150 = vsub.f32 %v743, %v1124
      %v1151 = vsub.f32 %v747, %v1125
      %v1152 = vsub.f32 %v749, %v1125
      %v1153 = vsub.f32 %v751, %v1126
      %v1154 = vsub.f32 %v753, %v1126
      %v1155 = vsub.f32 %v757, %v1127
      %v1156 = vsub.f32 %v759, %v1127
      %v1157 = vsub.f32 %v761, %v1128
      %v1158 = vsub.f32 %v763, %v1128
      %v1159 = vsub.f32 %v767, %v1129
      %v1160 = vsub.f32 %v769, %v1129
      %v1161 = vsub.f32 %v771, %v1130
      %v1162 = vsub.f32 %v773, %v1130
      %v1163 = vsel %vm873, %v1131, 0.0
      %v1164 = vsel %vm874, %v1132, 0.0
      %v1165 = vsel %vm873, %v1133, 0.0
      %v1166 = vsel %vm874, %v1134, 0.0
      %v1167 = vsel %vm873, %v1135, 0.0
      %v1168 = vsel %vm874, %v1136, 0.0
      %v1169 = vsel %vm873, %v1137, 0.0
      %v1170 = vsel %vm874, %v1138, 0.0
      %v1171 = vsel %vm873, %v1139, 0.0
      %v1172 = vsel %vm874, %v1140, 0.0
      %v1173 = vsel %vm873, %v1141, 0.0
      %v1174 = vsel %vm874, %v1142, 0.0
      %v1175 = vsel %vm873, %v1143, 0.0
      %v1176 = vsel %vm874, %v1144, 0.0
      %v1177 = vsel %vm873, %v1145, 0.0
      %v1178 = vsel %vm874, %v1146, 0.0
      %v1179 = vsel %vm873, %v1147, 0.0
      %v1180 = vsel %vm874, %v1148, 0.0
      %v1181 = vsel %vm873, %v1149, 0.0
      %v1182 = vsel %vm874, %v1150, 0.0
      %v1183 = vsel %vm873, %v1151, 0.0
      %v1184 = vsel %vm874, %v1152, 0.0
      %v1185 = vsel %vm873, %v1153, 0.0
      %v1186 = vsel %vm874, %v1154, 0.0
      %v1187 = vsel %vm873, %v1155, 0.0
      %v1188 = vsel %vm874, %v1156, 0.0
      %v1189 = vsel %vm873, %v1157, 0.0
      %v1190 = vsel %vm874, %v1158, 0.0
      %v1191 = vsel %vm873, %v1159, 0.0
      %v1192 = vsel %vm874, %v1160, 0.0
      %v1193 = vsel %vm873, %v1161, 0.0
      %v1194 = vsel %vm874, %v1162, 0.0
      %v1195 = vmul.f32 %v1163, %v1163
      %v1196 = vmul.f32 %v1164, %v1164
      %v1197 = vmul.f32 %v1165, %v1165
      %v1198 = vmul.f32 %v1166, %v1166
      %v1199 = vmul.f32 %v1167, %v1167
      %v1200 = vmul.f32 %v1168, %v1168
      %v1201 = vmul.f32 %v1169, %v1169
      %v1202 = vmul.f32 %v1170, %v1170
      %v1203 = vmul.f32 %v1171, %v1171
      %v1204 = vmul.f32 %v1172, %v1172
      %v1205 = vmul.f32 %v1173, %v1173
      %v1206 = vmul.f32 %v1174, %v1174
      %v1207 = vmul.f32 %v1175, %v1175
      %v1208 = vmul.f32 %v1176, %v1176
      %v1209 = vmul.f32 %v1177, %v1177
      %v1210 = vmul.f32 %v1178, %v1178
      %v1211 = vmul.f32 %v1179, %v1179
      %v1212 = vmul.f32 %v1180, %v1180
      %v1213 = vmul.f32 %v1181, %v1181
      %v1214 = vmul.f32 %v1182, %v1182
      %v1215 = vmul.f32 %v1183, %v1183
      %v1216 = vmul.f32 %v1184, %v1184
      %v1217 = vmul.f32 %v1185, %v1185
      %v1218 = vmul.f32 %v1186, %v1186
      %v1219 = vmul.f32 %v1187, %v1187
      %v1220 = vmul.f32 %v1188, %v1188
      %v1221 = vmul.f32 %v1189, %v1189
      %v1222 = vmul.f32 %v1190, %v1190
      %v1223 = vmul.f32 %v1191, %v1191
      %v1224 = vmul.f32 %v1192, %v1192
      %v1225 = vmul.f32 %v1193, %v1193
      %v1226 = vmul.f32 %v1194, %v1194
      %v1227 = vadd.f32 %v1195, %v1196
      %1228 = vadd.xlane.f32.xlu0 %v1227
      %v1229 = vpop.xlane.xlu0 %1228
      %v1230 = vadd.f32 %v1197, %v1198
      %1231 = vadd.xlane.f32.xlu0 %v1230
      %v1232 = vpop.xlane.xlu0 %1231
      %v1233 = vadd.f32 %v1199, %v1200
      %1234 = vadd.xlane.f32.xlu0 %v1233
      %v1235 = vpop.xlane.xlu0 %1234
      %v1236 = vadd.f32 %v1201, %v1202
      %1237 = vadd.xlane.f32.xlu0 %v1236
      %v1238 = vpop.xlane.xlu0 %1237
      %v1239 = vadd.f32 %v1203, %v1204
      %1240 = vadd.xlane.f32.xlu0 %v1239
      %v1241 = vpop.xlane.xlu0 %1240
      %v1242 = vadd.f32 %v1205, %v1206
      %1243 = vadd.xlane.f32.xlu0 %v1242
      %v1244 = vpop.xlane.xlu0 %1243
      %v1245 = vadd.f32 %v1207, %v1208
      %1246 = vadd.xlane.f32.xlu0 %v1245
      %v1247 = vpop.xlane.xlu0 %1246
      %v1248 = vadd.f32 %v1209, %v1210
      %1249 = vadd.xlane.f32.xlu0 %v1248
      %v1250 = vpop.xlane.xlu0 %1249
      %v1251 = vadd.f32 %v1211, %v1212
      %1252 = vadd.xlane.f32.xlu0 %v1251
      %v1253 = vpop.xlane.xlu0 %1252
      %v1254 = vadd.f32 %v1213, %v1214
      %1255 = vadd.xlane.f32.xlu0 %v1254
      %v1256 = vpop.xlane.xlu0 %1255
      %v1257 = vadd.f32 %v1215, %v1216
      %1258 = vadd.xlane.f32.xlu0 %v1257
      %v1259 = vpop.xlane.xlu0 %1258
      %v1260 = vadd.f32 %v1217, %v1218
      %1261 = vadd.xlane.f32.xlu0 %v1260
      %v1262 = vpop.xlane.xlu0 %1261
      %v1263 = vadd.f32 %v1219, %v1220
      %1264 = vadd.xlane.f32.xlu0 %v1263
      %v1265 = vpop.xlane.xlu0 %1264
      %v1266 = vadd.f32 %v1221, %v1222
      %1267 = vadd.xlane.f32.xlu0 %v1266
      %v1268 = vpop.xlane.xlu0 %1267
      %v1269 = vadd.f32 %v1223, %v1224
      %1270 = vadd.xlane.f32.xlu0 %v1269
      %v1271 = vpop.xlane.xlu0 %1270
      %v1272 = vadd.f32 %v1225, %v1226
      %1273 = vadd.xlane.f32.xlu0 %v1272
      %v1274 = vpop.xlane.xlu0 %1273
      %v1275 = vmul.f32 %v1229, 0.015625
      %v1276 = vmul.f32 %v1232, 0.015625
      %v1277 = vmul.f32 %v1235, 0.015625
      %v1278 = vmul.f32 %v1238, 0.015625
      %v1279 = vmul.f32 %v1241, 0.015625
      %v1280 = vmul.f32 %v1244, 0.015625
      %v1281 = vmul.f32 %v1247, 0.015625
      %v1282 = vmul.f32 %v1250, 0.015625
      %v1283 = vmul.f32 %v1253, 0.015625
      %v1284 = vmul.f32 %v1256, 0.015625
      %v1285 = vmul.f32 %v1259, 0.015625
      %v1286 = vmul.f32 %v1262, 0.015625
      %v1287 = vmul.f32 %v1265, 0.015625
      %v1288 = vmul.f32 %v1268, 0.015625
      %v1289 = vmul.f32 %v1271, 0.015625
      %v1290 = vmul.f32 %v1274, 0.015625
      %v1291 = vadd.f32 %v1275, 1e-05
      %v1292 = vadd.f32 %v1276, 1e-05
      %v1293 = vadd.f32 %v1277, 1e-05
      %v1294 = vadd.f32 %v1278, 1e-05
      %v1295 = vadd.f32 %v1279, 1e-05
      %v1296 = vadd.f32 %v1280, 1e-05
      %v1297 = vadd.f32 %v1281, 1e-05
      %v1298 = vadd.f32 %v1282, 1e-05
      %v1299 = vadd.f32 %v1283, 1e-05
      %v1300 = vadd.f32 %v1284, 1e-05
      %v1301 = vadd.f32 %v1285, 1e-05
      %v1302 = vadd.f32 %v1286, 1e-05
      %v1303 = vadd.f32 %v1287, 1e-05
      %v1304 = vadd.f32 %v1288, 1e-05
      %v1305 = vadd.f32 %v1289, 1e-05
      %v1306 = vadd.f32 %v1290, 1e-05
      %v1307 = vrsqrt.pop %v1291
      %v1308 = vrsqrt.pop %v1292
      %v1309 = vrsqrt.pop %v1293
      %v1310 = vrsqrt.pop %v1294
      %v1311 = vrsqrt.pop %v1295
      %v1312 = vrsqrt.pop %v1296
      %v1313 = vrsqrt.pop %v1297
      %v1314 = vrsqrt.pop %v1298
      %v1315 = vrsqrt.pop %v1299
      %v1316 = vrsqrt.pop %v1300
      %v1317 = vrsqrt.pop %v1301
      %v1318 = vrsqrt.pop %v1302
      %v1319 = vrsqrt.pop %v1303
      %v1320 = vrsqrt.pop %v1304
      %v1321 = vrsqrt.pop %v1305
      %v1322 = vrsqrt.pop %v1306
      %v1323 = vmul.f32 %v1163, %v1307
      %v1324 = vmul.f32 %v1164, %v1307
      %v1325 = vmul.f32 %v1165, %v1308
      %v1326 = vmul.f32 %v1166, %v1308
      %v1327 = vmul.f32 %v1167, %v1309
      %v1328 = vmul.f32 %v1168, %v1309
      %v1329 = vmul.f32 %v1169, %v1310
      %v1330 = vmul.f32 %v1170, %v1310
      %v1331 = vmul.f32 %v1171, %v1311
      %v1332 = vmul.f32 %v1172, %v1311
      %v1333 = vmul.f32 %v1173, %v1312
      %v1334 = vmul.f32 %v1174, %v1312
      %v1335 = vmul.f32 %v1175, %v1313
      %v1336 = vmul.f32 %v1176, %v1313
      %v1337 = vmul.f32 %v1177, %v1314
      %v1338 = vmul.f32 %v1178, %v1314
      %v1339 = vmul.f32 %v1179, %v1315
      %v1340 = vmul.f32 %v1180, %v1315
      %v1341 = vmul.f32 %v1181, %v1316
      %v1342 = vmul.f32 %v1182, %v1316
      %v1343 = vmul.f32 %v1183, %v1317
      %v1344 = vmul.f32 %v1184, %v1317
      %v1345 = vmul.f32 %v1185, %v1318
      %v1346 = vmul.f32 %v1186, %v1318
      %v1347 = vmul.f32 %v1187, %v1319
      %v1348 = vmul.f32 %v1188, %v1319
      %v1349 = vmul.f32 %v1189, %v1320
      %v1350 = vmul.f32 %v1190, %v1320
      %v1351 = vmul.f32 %v1191, %v1321
      %v1352 = vmul.f32 %v1192, %v1321
      %v1353 = vmul.f32 %v1193, %v1322
      %v1354 = vmul.f32 %v1194, %v1322
      %v1355 = vadd.f32 %v1035, %v1323
      %v1356 = vadd.f32 %v1036, %v1324
      %v1357 = vadd.f32 %v1037, %v1325
      %v1358 = vadd.f32 %v1038, %v1326
      %v1359 = vadd.f32 %v1039, %v1327
      %v1360 = vadd.f32 %v1040, %v1328
      %v1361 = vadd.f32 %v1041, %v1329
      %v1362 = vadd.f32 %v1042, %v1330
      %v1363 = vadd.f32 %v1043, %v1331
      %v1364 = vadd.f32 %v1044, %v1332
      %v1365 = vadd.f32 %v1045, %v1333
      %v1366 = vadd.f32 %v1046, %v1334
      %v1367 = vadd.f32 %v1047, %v1335
      %v1368 = vadd.f32 %v1048, %v1336
      %v1369 = vadd.f32 %v1049, %v1337
      %v1370 = vadd.f32 %v1050, %v1338
      %v1371 = vadd.f32 %v1051, %v1339
      %v1372 = vadd.f32 %v1052, %v1340
      %v1373 = vadd.f32 %v1053, %v1341
      %v1374 = vadd.f32 %v1054, %v1342
      %v1375 = vadd.f32 %v1055, %v1343
      %v1376 = vadd.f32 %v1056, %v1344
      %v1377 = vadd.f32 %v1057, %v1345
      %v1378 = vadd.f32 %v1058, %v1346
      %v1379 = vadd.f32 %v1059, %v1347
      %v1380 = vadd.f32 %v1060, %v1348
      %v1381 = vadd.f32 %v1061, %v1349
      %v1382 = vadd.f32 %v1062, %v1350
      %v1383 = vadd.f32 %v1063, %v1351
      %v1384 = vadd.f32 %v1064, %v1352
      %v1385 = vadd.f32 %v1065, %v1353
      %v1386 = vadd.f32 %v1066, %v1354
      %v1387 = vxor.u32 %v1355, 2147483648
      %v1388 = vxor.u32 %v1356, 2147483648
      %v1389 = vxor.u32 %v1357, 2147483648
      %v1390 = vxor.u32 %v1358, 2147483648
      %v1391 = vxor.u32 %v1359, 2147483648
      %v1392 = vxor.u32 %v1360, 2147483648
      %v1393 = vxor.u32 %v1361, 2147483648
      %v1394 = vxor.u32 %v1362, 2147483648
      %v1395 = vxor.u32 %v1363, 2147483648
      %v1396 = vxor.u32 %v1364, 2147483648
      %v1397 = vxor.u32 %v1365, 2147483648
      %v1398 = vxor.u32 %v1366, 2147483648
      %v1399 = vxor.u32 %v1367, 2147483648
      %v1400 = vxor.u32 %v1368, 2147483648
      %v1401 = vxor.u32 %v1369, 2147483648
      %v1402 = vxor.u32 %v1370, 2147483648
      %v1403 = vxor.u32 %v1371, 2147483648
      %v1404 = vxor.u32 %v1372, 2147483648
      %v1405 = vxor.u32 %v1373, 2147483648
      %v1406 = vxor.u32 %v1374, 2147483648
      %v1407 = vxor.u32 %v1375, 2147483648
      %v1408 = vxor.u32 %v1376, 2147483648
      %v1409 = vxor.u32 %v1377, 2147483648
      %v1410 = vxor.u32 %v1378, 2147483648
      %v1411 = vxor.u32 %v1379, 2147483648
      %v1412 = vxor.u32 %v1380, 2147483648
      %v1413 = vxor.u32 %v1381, 2147483648
      %v1414 = vxor.u32 %v1382, 2147483648
      %v1415 = vxor.u32 %v1383, 2147483648
      %v1416 = vxor.u32 %v1384, 2147483648
      %v1417 = vxor.u32 %v1385, 2147483648
      %v1418 = vxor.u32 %v1386, 2147483648
      %v1419 = vmul.f32 %v1387, 1.442695
      %v1420 = vpow.pop %v1419
      %v1421 = vmul.f32 %v1388, 1.442695
      %v1422 = vpow.pop %v1421
      %v1423 = vmul.f32 %v1389, 1.442695
      %v1424 = vpow.pop %v1423
      %v1425 = vmul.f32 %v1390, 1.442695
      %v1426 = vpow.pop %v1425
      %v1427 = vmul.f32 %v1391, 1.442695
      %v1428 = vpow.pop %v1427
      %v1429 = vmul.f32 %v1392, 1.442695
      %v1430 = vpow.pop %v1429
      %v1431 = vmul.f32 %v1393, 1.442695
      %v1432 = vpow.pop %v1431
      %v1433 = vmul.f32 %v1394, 1.442695
      %v1434 = vpow.pop %v1433
      %v1435 = vmul.f32 %v1395, 1.442695
      %v1436 = vpow.pop %v1435
      %v1437 = vmul.f32 %v1396, 1.442695
      %v1438 = vpow.pop %v1437
      %v1439 = vmul.f32 %v1397, 1.442695
      %v1440 = vpow.pop %v1439
      %v1441 = vmul.f32 %v1398, 1.442695
      %v1442 = vpow.pop %v1441
      %v1443 = vmul.f32 %v1399, 1.442695
      %v1444 = vpow.pop %v1443
      %v1445 = vmul.f32 %v1400, 1.442695
      %v1446 = vpow.pop %v1445
      %v1447 = vmul.f32 %v1401, 1.442695
      %v1448 = vpow.pop %v1447
      %v1449 = vmul.f32 %v1402, 1.442695
      %v1450 = vpow.pop %v1449
      %v1451 = vmul.f32 %v1403, 1.442695
      %v1452 = vpow.pop %v1451
      %v1453 = vmul.f32 %v1404, 1.442695
      %v1454 = vpow.pop %v1453
      %v1455 = vmul.f32 %v1405, 1.442695
      %v1456 = vpow.pop %v1455
      %v1457 = vmul.f32 %v1406, 1.442695
      %v1458 = vpow.pop %v1457
      %v1459 = vmul.f32 %v1407, 1.442695
      %v1460 = vpow.pop %v1459
      %v1461 = vmul.f32 %v1408, 1.442695
      %v1462 = vpow.pop %v1461
      %v1463 = vmul.f32 %v1409, 1.442695
      %v1464 = vpow.pop %v1463
      %v1465 = vmul.f32 %v1410, 1.442695
      %v1466 = vpow.pop %v1465
      %v1467 = vmul.f32 %v1411, 1.442695
      %v1468 = vpow.pop %v1467
      %v1469 = vmul.f32 %v1412, 1.442695
      %v1470 = vpow.pop %v1469
      %v1471 = vmul.f32 %v1413, 1.442695
      %v1472 = vpow.pop %v1471
      %v1473 = vmul.f32 %v1414, 1.442695
      %v1474 = vpow.pop %v1473
      %v1475 = vmul.f32 %v1415, 1.442695
      %v1476 = vpow.pop %v1475
      %v1477 = vmul.f32 %v1416, 1.442695
      %v1478 = vpow.pop %v1477
      %v1479 = vmul.f32 %v1417, 1.442695
      %v1480 = vpow.pop %v1479
      %v1481 = vmul.f32 %v1418, 1.442695
      %v1482 = vpow.pop %v1481
      %v1483 = vadd.f32 %v1420, 1.0
      %v1484 = vadd.f32 %v1422, 1.0
      %v1485 = vadd.f32 %v1424, 1.0
      %v1486 = vadd.f32 %v1426, 1.0
      %v1487 = vadd.f32 %v1428, 1.0
      %v1488 = vadd.f32 %v1430, 1.0
      %v1489 = vadd.f32 %v1432, 1.0
      %v1490 = vadd.f32 %v1434, 1.0
      %v1491 = vadd.f32 %v1436, 1.0
      %v1492 = vadd.f32 %v1438, 1.0
      %v1493 = vadd.f32 %v1440, 1.0
      %v1494 = vadd.f32 %v1442, 1.0
      %v1495 = vadd.f32 %v1444, 1.0
      %v1496 = vadd.f32 %v1446, 1.0
      %v1497 = vadd.f32 %v1448, 1.0
      %v1498 = vadd.f32 %v1450, 1.0
      %v1499 = vadd.f32 %v1452, 1.0
      %v1500 = vadd.f32 %v1454, 1.0
      %v1501 = vadd.f32 %v1456, 1.0
      %v1502 = vadd.f32 %v1458, 1.0
      %v1503 = vadd.f32 %v1460, 1.0
      %v1504 = vadd.f32 %v1462, 1.0
      %v1505 = vadd.f32 %v1464, 1.0
      %v1506 = vadd.f32 %v1466, 1.0
      %v1507 = vadd.f32 %v1468, 1.0
      %v1508 = vadd.f32 %v1470, 1.0
      %v1509 = vadd.f32 %v1472, 1.0
      %v1510 = vadd.f32 %v1474, 1.0
      %v1511 = vadd.f32 %v1476, 1.0
      %v1512 = vadd.f32 %v1478, 1.0
      %v1513 = vadd.f32 %v1480, 1.0
      %v1514 = vadd.f32 %v1482, 1.0
      %v1515 = vrcp.pop %v1483
      %v1516 = vmul.f32 1.0, %v1515
      %v1517 = vrcp.pop %v1484
      %v1518 = vmul.f32 1.0, %v1517
      %v1519 = vrcp.pop %v1485
      %v1520 = vmul.f32 1.0, %v1519
      %v1521 = vrcp.pop %v1486
      %v1522 = vmul.f32 1.0, %v1521
      %v1523 = vrcp.pop %v1487
      %v1524 = vmul.f32 1.0, %v1523
      %v1525 = vrcp.pop %v1488
      %v1526 = vmul.f32 1.0, %v1525
      %v1527 = vrcp.pop %v1489
      %v1528 = vmul.f32 1.0, %v1527
      %v1529 = vrcp.pop %v1490
      %v1530 = vmul.f32 1.0, %v1529
      %v1531 = vrcp.pop %v1491
      %v1532 = vmul.f32 1.0, %v1531
      %v1533 = vrcp.pop %v1492
      %v1534 = vmul.f32 1.0, %v1533
      %v1535 = vrcp.pop %v1493
      %v1536 = vmul.f32 1.0, %v1535
      %v1537 = vrcp.pop %v1494
      %v1538 = vmul.f32 1.0, %v1537
      %v1539 = vrcp.pop %v1495
      %v1540 = vmul.f32 1.0, %v1539
      %v1541 = vrcp.pop %v1496
      %v1542 = vmul.f32 1.0, %v1541
      %v1543 = vrcp.pop %v1497
      %v1544 = vmul.f32 1.0, %v1543
      %v1545 = vrcp.pop %v1498
      %v1546 = vmul.f32 1.0, %v1545
      %v1547 = vrcp.pop %v1499
      %v1548 = vmul.f32 1.0, %v1547
      %v1549 = vrcp.pop %v1500
      %v1550 = vmul.f32 1.0, %v1549
      %v1551 = vrcp.pop %v1501
      %v1552 = vmul.f32 1.0, %v1551
      %v1553 = vrcp.pop %v1502
      %v1554 = vmul.f32 1.0, %v1553
      %v1555 = vrcp.pop %v1503
      %v1556 = vmul.f32 1.0, %v1555
      %v1557 = vrcp.pop %v1504
      %v1558 = vmul.f32 1.0, %v1557
      %v1559 = vrcp.pop %v1505
      %v1560 = vmul.f32 1.0, %v1559
      %v1561 = vrcp.pop %v1506
      %v1562 = vmul.f32 1.0, %v1561
      %v1563 = vrcp.pop %v1507
      %v1564 = vmul.f32 1.0, %v1563
      %v1565 = vrcp.pop %v1508
      %v1566 = vmul.f32 1.0, %v1565
      %v1567 = vrcp.pop %v1509
      %v1568 = vmul.f32 1.0, %v1567
      %v1569 = vrcp.pop %v1510
      %v1570 = vmul.f32 1.0, %v1569
      %v1571 = vrcp.pop %v1511
      %v1572 = vmul.f32 1.0, %v1571
      %v1573 = vrcp.pop %v1512
      %v1574 = vmul.f32 1.0, %v1573
      %v1575 = vrcp.pop %v1513
      %v1576 = vmul.f32 1.0, %v1575
      %v1577 = vrcp.pop %v1514
      %v1578 = vmul.f32 1.0, %v1577
      %v1579 = vld [vmem:[%s2 + $0x8] sm:$0xf]
      %v1580 = vld [vmem:[%s2 + $0x14] sm:$0xf]
      %v1581 = vld [vmem:[%s2 + $0x20] sm:$0xf]
      %v1582 = vld [vmem:[%s2 + $0x2c] sm:$0xf]
      %v1583 = vld [vmem:[%s2 + $0x38] sm:$0xf]
      %v1584 = vld [vmem:[%s2 + $0x44] sm:$0xf]
      %v1585 = vld [vmem:[%s2 + $0x50] sm:$0xf]
      %v1586 = vld [vmem:[%s2 + $0x5c] sm:$0xf]
      %v1587 = vld [vmem:[%s4 + $0x2] sm:$0x1]
      %v1589 = vlaneseq
      %v1590 = vshrl.u32 %v1589, 7
      %v1591 = vsub.s32 0, %v1590
      %v1592 = vrot.slane %v1587, %v1591
      %v1602 = vunpack.c.l.b16 %v1579
      %v1603 = vunpack.c.l.b16 %v1580
      %v1604 = vunpack.c.l.b16 %v1581
      %v1605 = vunpack.c.l.b16 %v1582
      %v1606 = vunpack.c.l.b16 %v1583
      %v1607 = vunpack.c.l.b16 %v1584
      %v1608 = vunpack.c.l.b16 %v1585
      %v1609 = vunpack.c.l.b16 %v1586
      %v1610 = vpack.c.b16 %v1603, %v1602
      %v1611 = vpack.c.b16 %v1605, %v1604
      %v1612 = vpack.c.b16 %v1607, %v1606
      %v1613 = vpack.c.b16 %v1609, %v1608
      %1618 = vmatprep.subr.bf16.mxu0 0
      %1619 = vmatpush1.bf16.msra.mxu0 %v1610
      %1620 = vmatprep.subr.bf16.mxu0 0
      %1621 = vmatpush1.bf16.msra.mxu0 %v1611
      %1622 = vmatprep.subr.bf16.mxu0 0
      %1623 = vmatpush1.bf16.msra.mxu0 %v1612
      %1624 = vmatprep.subr.bf16.mxu0 0
      %1625 = vmatpush1.bf16.msra.mxu0 %v1613
      %1626 = vmatprep.subr.bf16.mxu0 0
      %1627 = vmatpush1.bf16.msra.mxu0 0
      %1628 = vmatprep.subr.bf16.mxu0 0
      %1629 = vmatpush1.bf16.msra.mxu0 0
      %1630 = vmatprep.subr.bf16.mxu0 0
      %1631 = vmatpush1.bf16.msra.mxu0 0
      %1632 = vmatprep.subr.bf16.mxu0 0
      %1633 = vmatpush1.bf16.msra.mxu0 0
      %1634 = vmatprep.subr.bf16.mxu0 0
      %1635 = vmatpush1.bf16.msra.mxu0 0
      %1636 = vmatprep.subr.bf16.mxu0 0
      %1637 = vmatpush1.bf16.msra.mxu0 0
      %1638 = vmatprep.subr.bf16.mxu0 0
      %1639 = vmatpush1.bf16.msra.mxu0 0
      %1640 = vmatprep.subr.bf16.mxu0 0
      %1641 = vmatpush1.bf16.msra.mxu0 0
      %1642 = vmatprep.subr.bf16.mxu0 0
      %1643 = vmatpush1.bf16.msra.mxu0 0
      %1644 = vmatprep.subr.bf16.mxu0 0
      %1645 = vmatpush1.bf16.msra.mxu0 0
      %1646 = vmatprep.subr.bf16.mxu0 0
      %1647 = vmatpush1.bf16.msra.mxu0 0
      %1648 = vmatprep.subr.bf16.mxu0 0
      %1649 = vmatpush1.bf16.msra.mxu0 0
      %1650 = vmatprep.mubr.bf16.mxu0 0
      %1651 = vmatmul.mubr.bf16.gmra.mrb[0].mxu0 %v418
      %v1652 = vpop.f32.mrb[0].mxu0
      %v1653 = vadd.f32 %v1592, %v1652
      %v1654 = vpop.f32.mrb[0].mxu0
      %v1655 = vpop.f32.mrb[0].mxu0
      %v1656 = vadd.f32 %v1592, %v1655
      %v1657 = vpop.f32.mrb[0].mxu0
      %1658 = vmatprep.mubr.bf16.mxu0 0
      %1659 = vmatmul.mubr.bf16.gmra.mrb[0].mxu0 %v421
      %v1660 = vpop.f32.mrb[0].mxu0
      %v1661 = vadd.f32 %v1592, %v1660
      %v1662 = vpop.f32.mrb[0].mxu0
      %v1663 = vpop.f32.mrb[0].mxu0
      %v1664 = vadd.f32 %v1592, %v1663
      %v1665 = vpop.f32.mrb[0].mxu0
      %1666 = vmatprep.mubr.bf16.mxu0 0
      %1667 = vmatmul.mubr.bf16.gmra.mrb[0].mxu0 %v424
      %v1668 = vpop.f32.mrb[0].mxu0
      %v1669 = vadd.f32 %v1592, %v1668
      %v1670 = vpop.f32.mrb[0].mxu0
      %v1671 = vpop.f32.mrb[0].mxu0
      %v1672 = vadd.f32 %v1592, %v1671
      %v1673 = vpop.f32.mrb[0].mxu0
      %1674 = vmatprep.mubr.bf16.mxu0 0
      %1675 = vmatmul.mubr.bf16.gmra.mrb[0].mxu0 %v427
      %v1676 = vpop.f32.mrb[0].mxu0
      %v1677 = vadd.f32 %v1592, %v1676
      %v1678 = vpop.f32.mrb[0].mxu0
      %v1679 = vpop.f32.mrb[0].mxu0
      %v1680 = vadd.f32 %v1592, %v1679
      %v1681 = vpop.f32.mrb[0].mxu0
      %1682 = vmatprep.mubr.bf16.mxu0 0
      %1683 = vmatmul.mubr.bf16.gmra.mrb[0].mxu0 %v430
      %v1684 = vpop.f32.mrb[0].mxu0
      %v1685 = vadd.f32 %v1592, %v1684
      %v1686 = vpop.f32.mrb[0].mxu0
      %v1687 = vpop.f32.mrb[0].mxu0
      %v1688 = vadd.f32 %v1592, %v1687
      %v1689 = vpop.f32.mrb[0].mxu0
      %1690 = vmatprep.mubr.bf16.mxu0 0
      %1691 = vmatmul.mubr.bf16.gmra.mrb[0].mxu0 %v433
      %v1692 = vpop.f32.mrb[0].mxu0
      %v1693 = vadd.f32 %v1592, %v1692
      %v1694 = vpop.f32.mrb[0].mxu0
      %v1695 = vpop.f32.mrb[0].mxu0
      %v1696 = vadd.f32 %v1592, %v1695
      %v1697 = vpop.f32.mrb[0].mxu0
      %1698 = vmatprep.mubr.bf16.mxu0 0
      %1699 = vmatmul.mubr.bf16.gmra.mrb[0].mxu0 %v436
      %v1700 = vpop.f32.mrb[0].mxu0
      %v1701 = vadd.f32 %v1592, %v1700
      %v1702 = vpop.f32.mrb[0].mxu0
      %v1703 = vpop.f32.mrb[0].mxu0
      %v1704 = vadd.f32 %v1592, %v1703
      %v1705 = vpop.f32.mrb[0].mxu0
      %1706 = vmatprep.mubr.bf16.mxu0 0
      %1707 = vmatmul.mubr.bf16.gmra.mrb[0].mxu0 %v439
      %v1708 = vpop.f32.mrb[0].mxu0
      %v1709 = vadd.f32 %v1592, %v1708
      %v1710 = vpop.f32.mrb[0].mxu0
      %v1711 = vpop.f32.mrb[0].mxu0
      %v1712 = vadd.f32 %v1592, %v1711
      %v1713 = vpop.f32.mrb[0].mxu0
      %1714 = vdwg.mxu0
      %v1715 = vld [vmem:[%s3 + $0x8] sm:$0xf]
      %v1716 = vld [vmem:[%s3 + $0x14] sm:$0xf]
      %v1717 = vld [vmem:[%s3 + $0x20] sm:$0xf]
      %v1718 = vld [vmem:[%s3 + $0x2c] sm:$0xf]
      %v1719 = vld [vmem:[%s3 + $0x38] sm:$0xf]
      %v1720 = vld [vmem:[%s3 + $0x44] sm:$0xf]
      %v1721 = vld [vmem:[%s3 + $0x50] sm:$0xf]
      %v1722 = vld [vmem:[%s3 + $0x5c] sm:$0xf]
      %v1723 = vld [vmem:[%s3 + $0x68] sm:$0xf]
      %v1724 = vld [vmem:[%s3 + $0x74] sm:$0xf]
      %v1725 = vld [vmem:[%s3 + $0x80] sm:$0xf]
      %v1726 = vld [vmem:[%s3 + $0x8c] sm:$0xf]
      %v1727 = vld [vmem:[%s3 + $0x98] sm:$0xf]
      %v1728 = vld [vmem:[%s3 + $0xa4] sm:$0xf]
      %v1729 = vld [vmem:[%s3 + $0xb0] sm:$0xf]
      %v1730 = vld [vmem:[%s3 + $0xbc] sm:$0xf]
      %v1731 = vld [vmem:[%s5 + $0x2] sm:$0x1]
      %v1733 = vlaneseq
      %v1734 = vshrl.u32 %v1733, 7
      %v1735 = vsub.s32 0, %v1734
      %v1736 = vrot.slane %v1731, %v1735
      %v1754 = vunpack.c.l.b16 %v1715
      %v1755 = vunpack.c.l.b16 %v1716
      %v1756 = vunpack.c.l.b16 %v1717
      %v1757 = vunpack.c.l.b16 %v1718
      %v1758 = vunpack.c.l.b16 %v1719
      %v1759 = vunpack.c.l.b16 %v1720
      %v1760 = vunpack.c.l.b16 %v1721
      %v1761 = vunpack.c.l.b16 %v1722
      %v1762 = vunpack.c.l.b16 %v1723
      %v1763 = vunpack.c.l.b16 %v1724
      %v1764 = vunpack.c.l.b16 %v1725
      %v1765 = vunpack.c.l.b16 %v1726
      %v1766 = vunpack.c.l.b16 %v1727
      %v1767 = vunpack.c.l.b16 %v1728
      %v1768 = vunpack.c.l.b16 %v1729
      %v1769 = vunpack.c.l.b16 %v1730
      %v1770 = vpack.c.b16 %v1755, %v1754
      %v1771 = vpack.c.b16 %v1757, %v1756
      %v1772 = vpack.c.b16 %v1759, %v1758
      %v1773 = vpack.c.b16 %v1761, %v1760
      %v1774 = vpack.c.b16 %v1763, %v1762
      %v1775 = vpack.c.b16 %v1765, %v1764
      %v1776 = vpack.c.b16 %v1767, %v1766
      %v1777 = vpack.c.b16 %v1769, %v1768
      %1786 = vmatprep.subr.bf16.mxu0 0
      %1787 = vmatpush1.bf16.msra.mxu0 %v1770
      %1788 = vmatprep.subr.bf16.mxu0 0
      %1789 = vmatpush1.bf16.msra.mxu0 %v1771
      %1790 = vmatprep.subr.bf16.mxu0 0
      %1791 = vmatpush1.bf16.msra.mxu0 %v1772
      %1792 = vmatprep.subr.bf16.mxu0 0
      %1793 = vmatpush1.bf16.msra.mxu0 %v1773
      %1794 = vmatprep.subr.bf16.mxu0 0
      %1795 = vmatpush1.bf16.msra.mxu0 %v1774
      %1796 = vmatprep.subr.bf16.mxu0 0
      %1797 = vmatpush1.bf16.msra.mxu0 %v1775
      %1798 = vmatprep.subr.bf16.mxu0 0
      %1799 = vmatpush1.bf16.msra.mxu0 %v1776
      %1800 = vmatprep.subr.bf16.mxu0 0
      %1801 = vmatpush1.bf16.msra.mxu0 %v1777
      %1802 = vmatprep.subr.bf16.mxu0 0
      %1803 = vmatpush1.bf16.msra.mxu0 0
      %1804 = vmatprep.subr.bf16.mxu0 0
      %1805 = vmatpush1.bf16.msra.mxu0 0
      %1806 = vmatprep.subr.bf16.mxu0 0
      %1807 = vmatpush1.bf16.msra.mxu0 0
      %1808 = vmatprep.subr.bf16.mxu0 0
      %1809 = vmatpush1.bf16.msra.mxu0 0
      %1810 = vmatprep.subr.bf16.mxu0 0
      %1811 = vmatpush1.bf16.msra.mxu0 0
      %1812 = vmatprep.subr.bf16.mxu0 0
      %1813 = vmatpush1.bf16.msra.mxu0 0
      %1814 = vmatprep.subr.bf16.mxu0 0
      %1815 = vmatpush1.bf16.msra.mxu0 0
      %1816 = vmatprep.subr.bf16.mxu0 0
      %1817 = vmatpush1.bf16.msra.mxu0 0
      %1818 = vmatprep.mubr.bf16.mxu0 0
      %1819 = vmatmul.mubr.bf16.gmra.mrb[0].mxu0 %v348
      %v1820 = vpop.f32.mrb[0].mxu0
      %v1821 = vadd.f32 %v1736, %v1820
      %v1822 = vpop.f32.mrb[0].mxu0
      %v1823 = vpop.f32.mrb[0].mxu0
      %v1824 = vadd.f32 %v1736, %v1823
      %v1825 = vpop.f32.mrb[0].mxu0
      %1826 = vmatprep.mubr.bf16.mxu0 0
      %1827 = vmatmul.mubr.bf16.gmra.mrb[0].mxu0 %v349
      %v1828 = vpop.f32.mrb[0].mxu0
      %v1829 = vadd.f32 %v1736, %v1828
      %v1830 = vpop.f32.mrb[0].mxu0
      %v1831 = vpop.f32.mrb[0].mxu0
      %v1832 = vadd.f32 %v1736, %v1831
      %v1833 = vpop.f32.mrb[0].mxu0
      %1834 = vmatprep.mubr.bf16.mxu0 0
      %1835 = vmatmul.mubr.bf16.gmra.mrb[0].mxu0 %v350
      %v1836 = vpop.f32.mrb[0].mxu0
      %v1837 = vadd.f32 %v1736, %v1836
      %v1838 = vpop.f32.mrb[0].mxu0
      %v1839 = vpop.f32.mrb[0].mxu0
      %v1840 = vadd.f32 %v1736, %v1839
      %v1841 = vpop.f32.mrb[0].mxu0
      %1842 = vmatprep.mubr.bf16.mxu0 0
      %1843 = vmatmul.mubr.bf16.gmra.mrb[0].mxu0 %v351
      %v1844 = vpop.f32.mrb[0].mxu0
      %v1845 = vadd.f32 %v1736, %v1844
      %v1846 = vpop.f32.mrb[0].mxu0
      %v1847 = vpop.f32.mrb[0].mxu0
      %v1848 = vadd.f32 %v1736, %v1847
      %v1849 = vpop.f32.mrb[0].mxu0
      %1850 = vmatprep.mubr.bf16.mxu0 0
      %1851 = vmatmul.mubr.bf16.gmra.mrb[0].mxu0 %v352
      %v1852 = vpop.f32.mrb[0].mxu0
      %v1853 = vadd.f32 %v1736, %v1852
      %v1854 = vpop.f32.mrb[0].mxu0
      %v1855 = vpop.f32.mrb[0].mxu0
      %v1856 = vadd.f32 %v1736, %v1855
      %v1857 = vpop.f32.mrb[0].mxu0
      %1858 = vmatprep.mubr.bf16.mxu0 0
      %1859 = vmatmul.mubr.bf16.gmra.mrb[0].mxu0 %v353
      %v1860 = vpop.f32.mrb[0].mxu0
      %v1861 = vadd.f32 %v1736, %v1860
      %v1862 = vpop.f32.mrb[0].mxu0
      %v1863 = vpop.f32.mrb[0].mxu0
      %v1864 = vadd.f32 %v1736, %v1863
      %v1865 = vpop.f32.mrb[0].mxu0
      %1866 = vmatprep.mubr.bf16.mxu0 0
      %1867 = vmatmul.mubr.bf16.gmra.mrb[0].mxu0 %v354
      %v1868 = vpop.f32.mrb[0].mxu0
      %v1869 = vadd.f32 %v1736, %v1868
      %v1870 = vpop.f32.mrb[0].mxu0
      %v1871 = vpop.f32.mrb[0].mxu0
      %v1872 = vadd.f32 %v1736, %v1871
      %v1873 = vpop.f32.mrb[0].mxu0
      %1874 = vmatprep.mubr.bf16.mxu0 0
      %1875 = vmatmul.mubr.bf16.gmra.mrb[0].mxu0 %v355
      %v1876 = vpop.f32.mrb[0].mxu0
      %v1877 = vadd.f32 %v1736, %v1876
      %v1878 = vpop.f32.mrb[0].mxu0
      %v1879 = vpop.f32.mrb[0].mxu0
      %v1880 = vadd.f32 %v1736, %v1879
      %v1881 = vpop.f32.mrb[0].mxu0
      %1882 = vdwg.mxu0
      %1883 = vadd.xlane.f32.xlu0 %v1653
      %v1884 = vpop.xlane.xlu0 %1883
      %1885 = vadd.xlane.f32.xlu0 %v1656
      %v1886 = vpop.xlane.xlu0 %1885
      %1887 = vadd.xlane.f32.xlu0 %v1661
      %v1888 = vpop.xlane.xlu0 %1887
      %1889 = vadd.xlane.f32.xlu0 %v1664
      %v1890 = vpop.xlane.xlu0 %1889
      %1891 = vadd.xlane.f32.xlu0 %v1669
      %v1892 = vpop.xlane.xlu0 %1891
      %1893 = vadd.xlane.f32.xlu0 %v1672
      %v1894 = vpop.xlane.xlu0 %1893
      %1895 = vadd.xlane.f32.xlu0 %v1677
      %v1896 = vpop.xlane.xlu0 %1895
      %1897 = vadd.xlane.f32.xlu0 %v1680
      %v1898 = vpop.xlane.xlu0 %1897
      %1899 = vadd.xlane.f32.xlu0 %v1685
      %v1900 = vpop.xlane.xlu0 %1899
      %1901 = vadd.xlane.f32.xlu0 %v1688
      %v1902 = vpop.xlane.xlu0 %1901
      %1903 = vadd.xlane.f32.xlu0 %v1693
      %v1904 = vpop.xlane.xlu0 %1903
      %1905 = vadd.xlane.f32.xlu0 %v1696
      %v1906 = vpop.xlane.xlu0 %1905
      %1907 = vadd.xlane.f32.xlu0 %v1701
      %v1908 = vpop.xlane.xlu0 %1907
      %1909 = vadd.xlane.f32.xlu0 %v1704
      %v1910 = vpop.xlane.xlu0 %1909
      %1911 = vadd.xlane.f32.xlu0 %v1709
      %v1912 = vpop.xlane.xlu0 %1911
      %1913 = vadd.xlane.f32.xlu0 %v1712
      %v1914 = vpop.xlane.xlu0 %1913
      %v1915 = vmul.f32 %v1884, 0.03125
      %v1916 = vmul.f32 %v1886, 0.03125
      %v1917 = vmul.f32 %v1888, 0.03125
      %v1918 = vmul.f32 %v1890, 0.03125
      %v1919 = vmul.f32 %v1892, 0.03125
      %v1920 = vmul.f32 %v1894, 0.03125
      %v1921 = vmul.f32 %v1896, 0.03125
      %v1922 = vmul.f32 %v1898, 0.03125
      %v1923 = vmul.f32 %v1900, 0.03125
      %v1924 = vmul.f32 %v1902, 0.03125
      %v1925 = vmul.f32 %v1904, 0.03125
      %v1926 = vmul.f32 %v1906, 0.03125
      %v1927 = vmul.f32 %v1908, 0.03125
      %v1928 = vmul.f32 %v1910, 0.03125
      %v1929 = vmul.f32 %v1912, 0.03125
      %v1930 = vmul.f32 %v1914, 0.03125
      %v1931 = vsub.f32 %v1653, %v1915
      %v1932 = vsub.f32 %v1656, %v1916
      %v1933 = vsub.f32 %v1661, %v1917
      %v1934 = vsub.f32 %v1664, %v1918
      %v1935 = vsub.f32 %v1669, %v1919
      %v1936 = vsub.f32 %v1672, %v1920
      %v1937 = vsub.f32 %v1677, %v1921
      %v1938 = vsub.f32 %v1680, %v1922
      %v1939 = vsub.f32 %v1685, %v1923
      %v1940 = vsub.f32 %v1688, %v1924
      %v1941 = vsub.f32 %v1693, %v1925
      %v1942 = vsub.f32 %v1696, %v1926
      %v1943 = vsub.f32 %v1701, %v1927
      %v1944 = vsub.f32 %v1704, %v1928
      %v1945 = vsub.f32 %v1709, %v1929
      %v1946 = vsub.f32 %v1712, %v1930
      %v1947 = vsel %vm280, 1, 0
      %vm1948 = vcmp.eq.s32.totalorder %v1947, 1
      %v1949 = vsel %vm1948, %v1931, 0.0
      %v1950 = vsel %vm1948, %v1932, 0.0
      %v1951 = vsel %vm1948, %v1933, 0.0
      %v1952 = vsel %vm1948, %v1934, 0.0
      %v1953 = vsel %vm1948, %v1935, 0.0
      %v1954 = vsel %vm1948, %v1936, 0.0
      %v1955 = vsel %vm1948, %v1937, 0.0
      %v1956 = vsel %vm1948, %v1938, 0.0
      %v1957 = vsel %vm1948, %v1939, 0.0
      %v1958 = vsel %vm1948, %v1940, 0.0
      %v1959 = vsel %vm1948, %v1941, 0.0
      %v1960 = vsel %vm1948, %v1942, 0.0
      %v1961 = vsel %vm1948, %v1943, 0.0
      %v1962 = vsel %vm1948, %v1944, 0.0
      %v1963 = vsel %vm1948, %v1945, 0.0
      %v1964 = vsel %vm1948, %v1946, 0.0
      %v1965 = vmul.f32 %v1949, %v1949
      %v1966 = vmul.f32 %v1950, %v1950
      %v1967 = vmul.f32 %v1951, %v1951
      %v1968 = vmul.f32 %v1952, %v1952
      %v1969 = vmul.f32 %v1953, %v1953
      %v1970 = vmul.f32 %v1954, %v1954
      %v1971 = vmul.f32 %v1955, %v1955
      %v1972 = vmul.f32 %v1956, %v1956
      %v1973 = vmul.f32 %v1957, %v1957
      %v1974 = vmul.f32 %v1958, %v1958
      %v1975 = vmul.f32 %v1959, %v1959
      %v1976 = vmul.f32 %v1960, %v1960
      %v1977 = vmul.f32 %v1961, %v1961
      %v1978 = vmul.f32 %v1962, %v1962
      %v1979 = vmul.f32 %v1963, %v1963
      %v1980 = vmul.f32 %v1964, %v1964
      %1981 = vadd.xlane.f32.xlu0 %v1965
      %v1982 = vpop.xlane.xlu0 %1981
      %1983 = vadd.xlane.f32.xlu0 %v1966
      %v1984 = vpop.xlane.xlu0 %1983
      %1985 = vadd.xlane.f32.xlu0 %v1967
      %v1986 = vpop.xlane.xlu0 %1985
      %1987 = vadd.xlane.f32.xlu0 %v1968
      %v1988 = vpop.xlane.xlu0 %1987
      %1989 = vadd.xlane.f32.xlu0 %v1969
      %v1990 = vpop.xlane.xlu0 %1989
      %1991 = vadd.xlane.f32.xlu0 %v1970
      %v1992 = vpop.xlane.xlu0 %1991
      %1993 = vadd.xlane.f32.xlu0 %v1971
      %v1994 = vpop.xlane.xlu0 %1993
      %1995 = vadd.xlane.f32.xlu0 %v1972
      %v1996 = vpop.xlane.xlu0 %1995
      %1997 = vadd.xlane.f32.xlu0 %v1973
      %v1998 = vpop.xlane.xlu0 %1997
      %1999 = vadd.xlane.f32.xlu0 %v1974
      %v2000 = vpop.xlane.xlu0 %1999
      %2001 = vadd.xlane.f32.xlu0 %v1975
      %v2002 = vpop.xlane.xlu0 %2001
      %2003 = vadd.xlane.f32.xlu0 %v1976
      %v2004 = vpop.xlane.xlu0 %2003
      %2005 = vadd.xlane.f32.xlu0 %v1977
      %v2006 = vpop.xlane.xlu0 %2005
      %2007 = vadd.xlane.f32.xlu0 %v1978
      %v2008 = vpop.xlane.xlu0 %2007
      %2009 = vadd.xlane.f32.xlu0 %v1979
      %v2010 = vpop.xlane.xlu0 %2009
      %2011 = vadd.xlane.f32.xlu0 %v1980
      %v2012 = vpop.xlane.xlu0 %2011
      %v2013 = vmul.f32 %v1982, 0.03125
      %v2014 = vmul.f32 %v1984, 0.03125
      %v2015 = vmul.f32 %v1986, 0.03125
      %v2016 = vmul.f32 %v1988, 0.03125
      %v2017 = vmul.f32 %v1990, 0.03125
      %v2018 = vmul.f32 %v1992, 0.03125
      %v2019 = vmul.f32 %v1994, 0.03125
      %v2020 = vmul.f32 %v1996, 0.03125
      %v2021 = vmul.f32 %v1998, 0.03125
      %v2022 = vmul.f32 %v2000, 0.03125
      %v2023 = vmul.f32 %v2002, 0.03125
      %v2024 = vmul.f32 %v2004, 0.03125
      %v2025 = vmul.f32 %v2006, 0.03125
      %v2026 = vmul.f32 %v2008, 0.03125
      %v2027 = vmul.f32 %v2010, 0.03125
      %v2028 = vmul.f32 %v2012, 0.03125
      %v2029 = vadd.f32 %v2013, 1e-05
      %v2030 = vadd.f32 %v2014, 1e-05
      %v2031 = vadd.f32 %v2015, 1e-05
      %v2032 = vadd.f32 %v2016, 1e-05
      %v2033 = vadd.f32 %v2017, 1e-05
      %v2034 = vadd.f32 %v2018, 1e-05
      %v2035 = vadd.f32 %v2019, 1e-05
      %v2036 = vadd.f32 %v2020, 1e-05
      %v2037 = vadd.f32 %v2021, 1e-05
      %v2038 = vadd.f32 %v2022, 1e-05
      %v2039 = vadd.f32 %v2023, 1e-05
      %v2040 = vadd.f32 %v2024, 1e-05
      %v2041 = vadd.f32 %v2025, 1e-05
      %v2042 = vadd.f32 %v2026, 1e-05
      %v2043 = vadd.f32 %v2027, 1e-05
      %v2044 = vadd.f32 %v2028, 1e-05
      %v2045 = vrsqrt.pop %v2029
      %v2046 = vrsqrt.pop %v2030
      %v2047 = vrsqrt.pop %v2031
      %v2048 = vrsqrt.pop %v2032
      %v2049 = vrsqrt.pop %v2033
      %v2050 = vrsqrt.pop %v2034
      %v2051 = vrsqrt.pop %v2035
      %v2052 = vrsqrt.pop %v2036
      %v2053 = vrsqrt.pop %v2037
      %v2054 = vrsqrt.pop %v2038
      %v2055 = vrsqrt.pop %v2039
      %v2056 = vrsqrt.pop %v2040
      %v2057 = vrsqrt.pop %v2041
      %v2058 = vrsqrt.pop %v2042
      %v2059 = vrsqrt.pop %v2043
      %v2060 = vrsqrt.pop %v2044
      %v2061 = vmul.f32 %v1949, %v2045
      %v2062 = vmul.f32 %v1950, %v2046
      %v2063 = vmul.f32 %v1951, %v2047
      %v2064 = vmul.f32 %v1952, %v2048
      %v2065 = vmul.f32 %v1953, %v2049
      %v2066 = vmul.f32 %v1954, %v2050
      %v2067 = vmul.f32 %v1955, %v2051
      %v2068 = vmul.f32 %v1956, %v2052
      %v2069 = vmul.f32 %v1957, %v2053
      %v2070 = vmul.f32 %v1958, %v2054
      %v2071 = vmul.f32 %v1959, %v2055
      %v2072 = vmul.f32 %v1960, %v2056
      %v2073 = vmul.f32 %v1961, %v2057
      %v2074 = vmul.f32 %v1962, %v2058
      %v2075 = vmul.f32 %v1963, %v2059
      %v2076 = vmul.f32 %v1964, %v2060
      %2077 = vadd.xlane.f32.xlu0 %v1821
      %v2078 = vpop.xlane.xlu0 %2077
      %2079 = vadd.xlane.f32.xlu0 %v1824
      %v2080 = vpop.xlane.xlu0 %2079
      %2081 = vadd.xlane.f32.xlu0 %v1829
      %v2082 = vpop.xlane.xlu0 %2081
      %2083 = vadd.xlane.f32.xlu0 %v1832
      %v2084 = vpop.xlane.xlu0 %2083
      %2085 = vadd.xlane.f32.xlu0 %v1837
      %v2086 = vpop.xlane.xlu0 %2085
      %2087 = vadd.xlane.f32.xlu0 %v1840
      %v2088 = vpop.xlane.xlu0 %2087
      %2089 = vadd.xlane.f32.xlu0 %v1845
      %v2090 = vpop.xlane.xlu0 %2089
      %2091 = vadd.xlane.f32.xlu0 %v1848
      %v2092 = vpop.xlane.xlu0 %2091
      %2093 = vadd.xlane.f32.xlu0 %v1853
      %v2094 = vpop.xlane.xlu0 %2093
      %2095 = vadd.xlane.f32.xlu0 %v1856
      %v2096 = vpop.xlane.xlu0 %2095
      %2097 = vadd.xlane.f32.xlu0 %v1861
      %v2098 = vpop.xlane.xlu0 %2097
      %2099 = vadd.xlane.f32.xlu0 %v1864
      %v2100 = vpop.xlane.xlu0 %2099
      %2101 = vadd.xlane.f32.xlu0 %v1869
      %v2102 = vpop.xlane.xlu0 %2101
      %2103 = vadd.xlane.f32.xlu0 %v1872
      %v2104 = vpop.xlane.xlu0 %2103
      %2105 = vadd.xlane.f32.xlu0 %v1877
      %v2106 = vpop.xlane.xlu0 %2105
      %2107 = vadd.xlane.f32.xlu0 %v1880
      %v2108 = vpop.xlane.xlu0 %2107
      %v2109 = vmul.f32 %v2078, 0.03125
      %v2110 = vmul.f32 %v2080, 0.03125
      %v2111 = vmul.f32 %v2082, 0.03125
      %v2112 = vmul.f32 %v2084, 0.03125
      %v2113 = vmul.f32 %v2086, 0.03125
      %v2114 = vmul.f32 %v2088, 0.03125
      %v2115 = vmul.f32 %v2090, 0.03125
      %v2116 = vmul.f32 %v2092, 0.03125
      %v2117 = vmul.f32 %v2094, 0.03125
      %v2118 = vmul.f32 %v2096, 0.03125
      %v2119 = vmul.f32 %v2098, 0.03125
      %v2120 = vmul.f32 %v2100, 0.03125
      %v2121 = vmul.f32 %v2102, 0.03125
      %v2122 = vmul.f32 %v2104, 0.03125
      %v2123 = vmul.f32 %v2106, 0.03125
      %v2124 = vmul.f32 %v2108, 0.03125
      %v2125 = vsub.f32 %v1821, %v2109
      %v2126 = vsub.f32 %v1824, %v2110
      %v2127 = vsub.f32 %v1829, %v2111
      %v2128 = vsub.f32 %v1832, %v2112
      %v2129 = vsub.f32 %v1837, %v2113
      %v2130 = vsub.f32 %v1840, %v2114
      %v2131 = vsub.f32 %v1845, %v2115
      %v2132 = vsub.f32 %v1848, %v2116
      %v2133 = vsub.f32 %v1853, %v2117
      %v2134 = vsub.f32 %v1856, %v2118
      %v2135 = vsub.f32 %v1861, %v2119
      %v2136 = vsub.f32 %v1864, %v2120
      %v2137 = vsub.f32 %v1869, %v2121
      %v2138 = vsub.f32 %v1872, %v2122
      %v2139 = vsub.f32 %v1877, %v2123
      %v2140 = vsub.f32 %v1880, %v2124
      %v2141 = vsel %vm1948, %v2125, 0.0
      %v2142 = vsel %vm1948, %v2126, 0.0
      %v2143 = vsel %vm1948, %v2127, 0.0
      %v2144 = vsel %vm1948, %v2128, 0.0
      %v2145 = vsel %vm1948, %v2129, 0.0
      %v2146 = vsel %vm1948, %v2130, 0.0
      %v2147 = vsel %vm1948, %v2131, 0.0
      %v2148 = vsel %vm1948, %v2132, 0.0
      %v2149 = vsel %vm1948, %v2133, 0.0
      %v2150 = vsel %vm1948, %v2134, 0.0
      %v2151 = vsel %vm1948, %v2135, 0.0
      %v2152 = vsel %vm1948, %v2136, 0.0
      %v2153 = vsel %vm1948, %v2137, 0.0
      %v2154 = vsel %vm1948, %v2138, 0.0
      %v2155 = vsel %vm1948, %v2139, 0.0
      %v2156 = vsel %vm1948, %v2140, 0.0
      %v2157 = vmul.f32 %v2141, %v2141
      %v2158 = vmul.f32 %v2142, %v2142
      %v2159 = vmul.f32 %v2143, %v2143
      %v2160 = vmul.f32 %v2144, %v2144
      %v2161 = vmul.f32 %v2145, %v2145
      %v2162 = vmul.f32 %v2146, %v2146
      %v2163 = vmul.f32 %v2147, %v2147
      %v2164 = vmul.f32 %v2148, %v2148
      %v2165 = vmul.f32 %v2149, %v2149
      %v2166 = vmul.f32 %v2150, %v2150
      %v2167 = vmul.f32 %v2151, %v2151
      %v2168 = vmul.f32 %v2152, %v2152
      %v2169 = vmul.f32 %v2153, %v2153
      %v2170 = vmul.f32 %v2154, %v2154
      %v2171 = vmul.f32 %v2155, %v2155
      %v2172 = vmul.f32 %v2156, %v2156
      %2173 = vadd.xlane.f32.xlu0 %v2157
      %v2174 = vpop.xlane.xlu0 %2173
      %2175 = vadd.xlane.f32.xlu0 %v2158
      %v2176 = vpop.xlane.xlu0 %2175
      %2177 = vadd.xlane.f32.xlu0 %v2159
      %v2178 = vpop.xlane.xlu0 %2177
      %2179 = vadd.xlane.f32.xlu0 %v2160
      %v2180 = vpop.xlane.xlu0 %2179
      %2181 = vadd.xlane.f32.xlu0 %v2161
      %v2182 = vpop.xlane.xlu0 %2181
      %2183 = vadd.xlane.f32.xlu0 %v2162
      %v2184 = vpop.xlane.xlu0 %2183
      %2185 = vadd.xlane.f32.xlu0 %v2163
      %v2186 = vpop.xlane.xlu0 %2185
      %2187 = vadd.xlane.f32.xlu0 %v2164
      %v2188 = vpop.xlane.xlu0 %2187
      %2189 = vadd.xlane.f32.xlu0 %v2165
      %v2190 = vpop.xlane.xlu0 %2189
      %2191 = vadd.xlane.f32.xlu0 %v2166
      %v2192 = vpop.xlane.xlu0 %2191
      %2193 = vadd.xlane.f32.xlu0 %v2167
      %v2194 = vpop.xlane.xlu0 %2193
      %2195 = vadd.xlane.f32.xlu0 %v2168
      %v2196 = vpop.xlane.xlu0 %2195
      %2197 = vadd.xlane.f32.xlu0 %v2169
      %v2198 = vpop.xlane.xlu0 %2197
      %2199 = vadd.xlane.f32.xlu0 %v2170
      %v2200 = vpop.xlane.xlu0 %2199
      %2201 = vadd.xlane.f32.xlu0 %v2171
      %v2202 = vpop.xlane.xlu0 %2201
      %2203 = vadd.xlane.f32.xlu0 %v2172
      %v2204 = vpop.xlane.xlu0 %2203
      %v2205 = vmul.f32 %v2174, 0.03125
      %v2206 = vmul.f32 %v2176, 0.03125
      %v2207 = vmul.f32 %v2178, 0.03125
      %v2208 = vmul.f32 %v2180, 0.03125
      %v2209 = vmul.f32 %v2182, 0.03125
      %v2210 = vmul.f32 %v2184, 0.03125
      %v2211 = vmul.f32 %v2186, 0.03125
      %v2212 = vmul.f32 %v2188, 0.03125
      %v2213 = vmul.f32 %v2190, 0.03125
      %v2214 = vmul.f32 %v2192, 0.03125
      %v2215 = vmul.f32 %v2194, 0.03125
      %v2216 = vmul.f32 %v2196, 0.03125
      %v2217 = vmul.f32 %v2198, 0.03125
      %v2218 = vmul.f32 %v2200, 0.03125
      %v2219 = vmul.f32 %v2202, 0.03125
      %v2220 = vmul.f32 %v2204, 0.03125
      %v2221 = vadd.f32 %v2205, 1e-05
      %v2222 = vadd.f32 %v2206, 1e-05
      %v2223 = vadd.f32 %v2207, 1e-05
      %v2224 = vadd.f32 %v2208, 1e-05
      %v2225 = vadd.f32 %v2209, 1e-05
      %v2226 = vadd.f32 %v2210, 1e-05
      %v2227 = vadd.f32 %v2211, 1e-05
      %v2228 = vadd.f32 %v2212, 1e-05
      %v2229 = vadd.f32 %v2213, 1e-05
      %v2230 = vadd.f32 %v2214, 1e-05
      %v2231 = vadd.f32 %v2215, 1e-05
      %v2232 = vadd.f32 %v2216, 1e-05
      %v2233 = vadd.f32 %v2217, 1e-05
      %v2234 = vadd.f32 %v2218, 1e-05
      %v2235 = vadd.f32 %v2219, 1e-05
      %v2236 = vadd.f32 %v2220, 1e-05
      %v2237 = vrsqrt.pop %v2221
      %v2238 = vrsqrt.pop %v2222
      %v2239 = vrsqrt.pop %v2223
      %v2240 = vrsqrt.pop %v2224
      %v2241 = vrsqrt.pop %v2225
      %v2242 = vrsqrt.pop %v2226
      %v2243 = vrsqrt.pop %v2227
      %v2244 = vrsqrt.pop %v2228
      %v2245 = vrsqrt.pop %v2229
      %v2246 = vrsqrt.pop %v2230
      %v2247 = vrsqrt.pop %v2231
      %v2248 = vrsqrt.pop %v2232
      %v2249 = vrsqrt.pop %v2233
      %v2250 = vrsqrt.pop %v2234
      %v2251 = vrsqrt.pop %v2235
      %v2252 = vrsqrt.pop %v2236
      %v2253 = vmul.f32 %v2141, %v2237
      %v2254 = vmul.f32 %v2142, %v2238
      %v2255 = vmul.f32 %v2143, %v2239
      %v2256 = vmul.f32 %v2144, %v2240
      %v2257 = vmul.f32 %v2145, %v2241
      %v2258 = vmul.f32 %v2146, %v2242
      %v2259 = vmul.f32 %v2147, %v2243
      %v2260 = vmul.f32 %v2148, %v2244
      %v2261 = vmul.f32 %v2149, %v2245
      %v2262 = vmul.f32 %v2150, %v2246
      %v2263 = vmul.f32 %v2151, %v2247
      %v2264 = vmul.f32 %v2152, %v2248
      %v2265 = vmul.f32 %v2153, %v2249
      %v2266 = vmul.f32 %v2154, %v2250
      %v2267 = vmul.f32 %v2155, %v2251
      %v2268 = vmul.f32 %v2156, %v2252
      %v2269 = vmul.f32 %v1518, %v2253
      %v2270 = vmul.f32 %v1522, %v2254
      %v2271 = vmul.f32 %v1526, %v2255
      %v2272 = vmul.f32 %v1530, %v2256
      %v2273 = vmul.f32 %v1534, %v2257
      %v2274 = vmul.f32 %v1538, %v2258
      %v2275 = vmul.f32 %v1542, %v2259
      %v2276 = vmul.f32 %v1546, %v2260
      %v2277 = vmul.f32 %v1550, %v2261
      %v2278 = vmul.f32 %v1554, %v2262
      %v2279 = vmul.f32 %v1558, %v2263
      %v2280 = vmul.f32 %v1562, %v2264
      %v2281 = vmul.f32 %v1566, %v2265
      %v2282 = vmul.f32 %v1570, %v2266
      %v2283 = vmul.f32 %v1574, %v2267
      %v2284 = vmul.f32 %v1578, %v2268
      %v2285 = vadd.f32 %v2061, %v2269
      %v2286 = vadd.f32 %v2062, %v2270
      %v2287 = vadd.f32 %v2063, %v2271
      %v2288 = vadd.f32 %v2064, %v2272
      %v2289 = vadd.f32 %v2065, %v2273
      %v2290 = vadd.f32 %v2066, %v2274
      %v2291 = vadd.f32 %v2067, %v2275
      %v2292 = vadd.f32 %v2068, %v2276
      %v2293 = vadd.f32 %v2069, %v2277
      %v2294 = vadd.f32 %v2070, %v2278
      %v2295 = vadd.f32 %v2071, %v2279
      %v2296 = vadd.f32 %v2072, %v2280
      %v2297 = vadd.f32 %v2073, %v2281
      %v2298 = vadd.f32 %v2074, %v2282
      %v2299 = vadd.f32 %v2075, %v2283
      %v2300 = vadd.f32 %v2076, %v2284
      %v2301 = vtanh.pop %v2285
      %v2302 = vtanh.pop %v2286
      %v2303 = vtanh.pop %v2287
      %v2304 = vtanh.pop %v2288
      %v2305 = vtanh.pop %v2289
      %v2306 = vtanh.pop %v2290
      %v2307 = vtanh.pop %v2291
      %v2308 = vtanh.pop %v2292
      %v2309 = vtanh.pop %v2293
      %v2310 = vtanh.pop %v2294
      %v2311 = vtanh.pop %v2295
      %v2312 = vtanh.pop %v2296
      %v2313 = vtanh.pop %v2297
      %v2314 = vtanh.pop %v2298
      %v2315 = vtanh.pop %v2299
      %v2316 = vtanh.pop %v2300
      %v2317 = vsub.f32 1.0, %v1516
      %v2318 = vsub.f32 1.0, %v1520
      %v2319 = vsub.f32 1.0, %v1524
      %v2320 = vsub.f32 1.0, %v1528
      %v2321 = vsub.f32 1.0, %v1532
      %v2322 = vsub.f32 1.0, %v1536
      %v2323 = vsub.f32 1.0, %v1540
      %v2324 = vsub.f32 1.0, %v1544
      %v2325 = vsub.f32 1.0, %v1548
      %v2326 = vsub.f32 1.0, %v1552
      %v2327 = vsub.f32 1.0, %v1556
      %v2328 = vsub.f32 1.0, %v1560
      %v2329 = vsub.f32 1.0, %v1564
      %v2330 = vsub.f32 1.0, %v1568
      %v2331 = vsub.f32 1.0, %v1572
      %v2332 = vsub.f32 1.0, %v1576
      %v2333 = vmul.f32 %v2317, %v332
      %v2334 = vmul.f32 %v2318, %v333
      %v2335 = vmul.f32 %v2319, %v334
      %v2336 = vmul.f32 %v2320, %v335
      %v2337 = vmul.f32 %v2321, %v336
      %v2338 = vmul.f32 %v2322, %v337
      %v2339 = vmul.f32 %v2323, %v338
      %v2340 = vmul.f32 %v2324, %v339
      %v2341 = vmul.f32 %v2325, %v340
      %v2342 = vmul.f32 %v2326, %v341
      %v2343 = vmul.f32 %v2327, %v342
      %v2344 = vmul.f32 %v2328, %v343
      %v2345 = vmul.f32 %v2329, %v344
      %v2346 = vmul.f32 %v2330, %v345
      %v2347 = vmul.f32 %v2331, %v346
      %v2348 = vmul.f32 %v2332, %v347
      %v2349 = vmul.f32 %v1516, %v2301
      %v2350 = vmul.f32 %v1520, %v2302
      %v2351 = vmul.f32 %v1524, %v2303
      %v2352 = vmul.f32 %v1528, %v2304
      %v2353 = vmul.f32 %v1532, %v2305
      %v2354 = vmul.f32 %v1536, %v2306
      %v2355 = vmul.f32 %v1540, %v2307
      %v2356 = vmul.f32 %v1544, %v2308
      %v2357 = vmul.f32 %v1548, %v2309
      %v2358 = vmul.f32 %v1552, %v2310
      %v2359 = vmul.f32 %v1556, %v2311
      %v2360 = vmul.f32 %v1560, %v2312
      %v2361 = vmul.f32 %v1564, %v2313
      %v2362 = vmul.f32 %v1568, %v2314
      %v2363 = vmul.f32 %v1572, %v2315
      %v2364 = vmul.f32 %v1576, %v2316
      %v2365 = vadd.f32 %v2333, %v2349
      %v2366 = vadd.f32 %v2334, %v2350
      %v2367 = vadd.f32 %v2335, %v2351
      %v2368 = vadd.f32 %v2336, %v2352
      %v2369 = vadd.f32 %v2337, %v2353
      %v2370 = vadd.f32 %v2338, %v2354
      %v2371 = vadd.f32 %v2339, %v2355
      %v2372 = vadd.f32 %v2340, %v2356
      %v2373 = vadd.f32 %v2341, %v2357
      %v2374 = vadd.f32 %v2342, %v2358
      %v2375 = vadd.f32 %v2343, %v2359
      %v2376 = vadd.f32 %v2344, %v2360
      %v2377 = vadd.f32 %v2345, %v2361
      %v2378 = vadd.f32 %v2346, %v2362
      %v2379 = vadd.f32 %v2347, %v2363
      %v2380 = vadd.f32 %v2348, %v2364
      %2381 = vst [vmem:[%s275] sm:$0xff] %v2365
      %2382 = vst [vmem:[%s275 + $0x8] sm:$0xff] %v2366
      %2383 = vst [vmem:[%s275 + $0x10] sm:$0xff] %v2367
      %2384 = vst [vmem:[%s275 + $0x18] sm:$0xff] %v2368
      %2385 = vst [vmem:[%s275 + $0x20] sm:$0xff] %v2369
      %2386 = vst [vmem:[%s275 + $0x28] sm:$0xff] %v2370
      %2387 = vst [vmem:[%s275 + $0x30] sm:$0xff] %v2371
      %2388 = vst [vmem:[%s275 + $0x38] sm:$0xff] %v2372
      %2389 = vst [vmem:[%s275 + $0x40] sm:$0xff] %v2373
      %2390 = vst [vmem:[%s275 + $0x48] sm:$0xff] %v2374
      %2391 = vst [vmem:[%s275 + $0x50] sm:$0xff] %v2375
      %2392 = vst [vmem:[%s275 + $0x58] sm:$0xff] %v2376
      %2393 = vst [vmem:[%s275 + $0x60] sm:$0xff] %v2377
      %2394 = vst [vmem:[%s275 + $0x68] sm:$0xff] %v2378
      %2395 = vst [vmem:[%s275 + $0x70] sm:$0xff] %v2379
      %2396 = vst [vmem:[%s275 + $0x78] sm:$0xff] %v2380
      %s2397 = smul.u32 16, %s17
      %p2398 = scmp.lt.s32.totalorder %s2397, 31
      %s2399 = scalar_select %p2398, %s2397, 31
      %s2400 = smul.addr %s2399, 8
      %s2401 = scalar_lea.vmem %s6, %s2400
      // Predicated region
      $region45: #{layer_norm_gru_cell.1} parent=43 // pred_check
        %p2402 = pneg %p171
      $region46: #{layer_norm_gru_cell.1} parent=43 // pred_check_branch
        %2404 = sbr.rel (%p2402) target = $region48
      $region47: #{layer_norm_gru_cell.1} parent=43 // pred_region
        %s2405 = smul.u32 16, %s17
      $region48: #{layer_norm_gru_cell.1} parent=43 // pred_fallthru
        _
    $region44: #{layer_norm_gru_cell.1} parent=5 // pred_fallthru
      _
    %p2406 = scmp.le.s32.totalorder 2, %s12
    // Predicated region
    $region49: #{layer_norm_gru_cell.1} parent=5 // pred_check
      %p2407 = pneg %p2406
    $region50: #{layer_norm_gru_cell.1} parent=5 // pred_check_branch
      %2409 = sbr.rel (%p2407) target = $region52
    $region51: #{layer_norm_gru_cell.1} parent=5 // pred_region
      %s2410 = ssub.s32 %s12, 2
      // Predicated region
      $region53: #{layer_norm_gru_cell.1} parent=51 // pred_check
        %p2411 = pneg %p177
      $region54: #{layer_norm_gru_cell.1} parent=51 // pred_check_branch
        %2413 = sbr.rel (%p2411) target = $region56
      $region55: #{layer_norm_gru_cell.1} parent=51 // pred_region
        %s2414 = smul.u32 16, %s18
        %p2415 = scmp.lt.s32.totalorder %s2414, 31
        %s2416 = scalar_select %p2415, %s2414, 31
        %s2417 = smul.addr %s2416, 8
        %s2418 = scalar_lea.vmem %s6, %s2417
      $region56: #{layer_norm_gru_cell.1} parent=51 // pred_fallthru
        _
    $region52: #{layer_norm_gru_cell.1} parent=5 // pred_fallthru
      _
  $region6: #{layer_norm_gru_cell.1} parent=0 // loop_footer
    %s16 = sadd.s32 1, %s12
  $region7: #{layer_norm_gru_cell.1} parent=0 // loop_footer_branch
    %11 = sbr.rel target = $region3
  $region8: #{layer_norm_gru_cell.1} parent=0 // loop_exit
    _

</llo_original>
